<compile_context>
chip_gen: v7x
topology: tpu7x:2x2x1
jax: 0.10.0
libtpu: 0.0.40
codegen_flags: <defaults>
</compile_context>

<pallas_src>
import math

import jax
import jax.numpy as jnp
from jax.experimental import pallas as pl
from jax.experimental.pallas import tpu as pltpu


# ----------------------------------------------------------------------------
# Kernel 1: multihead attention pooling with online softmax over the set axis.
# ----------------------------------------------------------------------------
def pma_pool_kernel(x_ref, m_ref, wk_ref, bk_ref, wv_ref, bv_ref, e_ref, et_ref,
                    o_ref, m_sc, l_sc, acc_sc):
    _, TN, S, D = x_ref.shape
    H = e_ref.shape[1]
    n_idx = pl.program_id(1)

    # Initialize the online-softmax state at the first N-tile of each batch row.
    @pl.when(n_idx == 0)
    def _():
        m_sc[...] = jnp.full_like(m_sc, -jnp.inf)
        l_sc[...] = jnp.zeros_like(l_sc)
        acc_sc[...] = jnp.zeros_like(acc_sc)

    # K / V projections as two separate lane-aligned MXU matmuls (inputs may be
    # bf16; accumulation is f32).
    x2 = x_ref[0].reshape(TN * S, D)
    k = (jnp.dot(x2, wk_ref[...], preferred_element_type=jnp.float32)
         + bk_ref[...]).reshape(TN, S, D)
    v = (jnp.dot(x2, wv_ref[...], preferred_element_type=jnp.float32)
         + bv_ref[...]).reshape(TN, S, D)

    m_seed = m_ref[...]                                           # (S, D) f32

    # Head-selector matrices are tiny resident inputs; `e` already carries the
    # 1/sqrt(D) logit scale, so no per-step scale multiply is needed.
    e = e_ref[...]                                                # (D, H)
    et = et_ref[...]                                              # (H, D)

    # Per-head logits for this N-tile: scores[n, s, h] = (1/sqrt(D)) * sum_{d in h} K*M.
    km = k * m_seed[None, :, :]                                   # (TN, S, D)
    scores = jnp.dot(km.reshape(TN * S, D), e,
                     preferred_element_type=jnp.float32).reshape(TN, S, H)

    # Online softmax over the set axis (streamed across grid axis 1).
    m_new = jnp.maximum(m_sc[...], jnp.max(scores, axis=0))       # (S, H)
    alpha = jnp.exp(m_sc[...] - m_new)                            # (S, H)
    p = jnp.exp(scores - m_new[None, :, :])                       # (TN, S, H)
    l_sc[...] = alpha * l_sc[...] + jnp.sum(p, axis=0)

    # Broadcast head weights back to feature lanes and pool V over this tile.
    p_full = jnp.dot(p.reshape(TN * S, H), et,
                     preferred_element_type=jnp.float32).reshape(TN, S, D)
    alpha_full = jnp.dot(alpha, et, preferred_element_type=jnp.float32)   # (S, D)
    acc_sc[...] = alpha_full * acc_sc[...] + jnp.sum(p_full * v, axis=0)
    m_sc[...] = m_new

    # Finalize: O = M + (sum_n p*V) / l, written once per batch row.
    # Exact division (approx reciprocal previously amplified through the two
    # BatchNorms and broke the tolerance).
    @pl.when(n_idx == pl.num_programs(1) - 1)
    def _():
        l_full = jnp.dot(l_sc[...], et, preferred_element_type=jnp.float32)  # (S, D)
        o = m_seed + acc_sc[...] / l_full
        o_ref[0] = o.astype(o_ref.dtype)


# ----------------------------------------------------------------------------
# Kernel 2: batch-coupled tail  BN0 -> fc_o + ReLU residual -> BN1,
# gridded over the seed axis (per-seed (B, D) @ (D, D) matmul, no kron weight).
# ----------------------------------------------------------------------------
def pma_tail_kernel(o_ref, wo_ref, bo_ref, g0_ref, b0_ref, g1_ref, b1_ref, out_ref):
    eps = 1e-5
    o = o_ref[0]                                                  # (B, D)
    g0 = g0_ref[0]; b0 = b0_ref[0]                                # (1, D)
    g1 = g1_ref[0]; b1 = b1_ref[0]

    # BatchNorm over the batch axis, per (seed, dim) feature (== BatchNorm1d(S*D)).
    mu0 = jnp.mean(o, axis=0, keepdims=True)
    var0 = jnp.mean((o - mu0) ** 2, axis=0, keepdims=True)
    o = (o - mu0) * jax.lax.rsqrt(var0 + eps) * g0 + b0

    # fc_o + ReLU residual.
    h = jnp.dot(o, wo_ref[...], preferred_element_type=jnp.float32) + bo_ref[...]
    o = o + jnp.maximum(h, 0.0)

    mu1 = jnp.mean(o, axis=0, keepdims=True)
    var1 = jnp.mean((o - mu1) ** 2, axis=0, keepdims=True)
    o = (o - mu1) * jax.lax.rsqrt(var1 + eps) * g1 + b1

    out_ref[0] = o.astype(out_ref.dtype)


# ----------------------------------------------------------------------------
# Wrapper
# ----------------------------------------------------------------------------
def _auto_tile_n(N, S, D, itemsize, vmem_budget_bytes=None):
    """Pick an N-tile whose (lane/sublane-padded) X slice stays within budget."""
    lane = 128
    if vmem_budget_bytes is None:
        # ~8 MiB per X buffer: big enough that the ~0.35us per-grid-step fixed
        # cost is negligible vs. the DMA even on v7x's 3.2 TB/s HBM, while a
        # 2-3 deep buffer still fits well under v7x's 64 MiB/TC VMEM.
        vmem_budget_bytes = 8 * 1024 * 1024
        try:
            info = pltpu.get_tpu_info()
            vmem_budget_bytes = min(vmem_budget_bytes,
                                    int(info.vmem_capacity_bytes) // 8)
        except Exception:
            pass  # CPU / interpret mode: keep the static default.
    padded_d = -(-D // lane) * lane
    padded_s = -(-S // 8) * 8
    per_n = padded_s * padded_d * itemsize
    t = int(max(1, min(N, vmem_budget_bytes // max(per_n, 1))))
    while N % t:
        t -= 1
    return t


def pma_forward(x, m, wk, bk, wv, bv, wo, bo, g0, b0, g1, b1, num_heads,
                tile_n=None, compute_dtype=jnp.bfloat16, x_buffers=2):
    """PMA forward.  Weights are (in, out); returns (B, S, D) float32."""
    B, N, S, D = x.shape
    H = num_heads
    assert D % H == 0
    ds = D // H
    itemsize = jnp.dtype(compute_dtype).itemsize
    if tile_n is None:
        tile_n = _auto_tile_n(N, S, D, itemsize)
    assert N % tile_n == 0, (N, tile_n)
    n_tiles = N // tile_n

    # bfloat16 X/W halves HBM traffic for the only large operand; the MXU still
    # accumulates in f32 and all post-MXU math stays f32.
    x_c = x.astype(compute_dtype)
    wk_c = wk.astype(compute_dtype)
    wv_c = wv.astype(compute_dtype)
    bk2 = bk.reshape(1, D).astype(jnp.float32)
    bv2 = bv.reshape(1, D).astype(jnp.float32)
    m_f = m.astype(jnp.float32)

    # One-hot head-selector matrices, built once on the host (the per-step
    # iota/compare/cast construction is gone).  `e` folds in the 1/sqrt(D)
    # logit scale; `et` broadcasts per-head quantities back to feature lanes.
    head_of_d = jnp.arange(D) // ds
    e = ((head_of_d[:, None] == jnp.arange(H)[None, :])
         .astype(jnp.float32) / math.sqrt(D))                     # (D, H)
    et = (jnp.arange(H)[:, None] == head_of_d[None, :]).astype(jnp.float32)  # (H, D)

    lane = 128
    x_tile_bytes = tile_n * (-(-S // 8) * 8) * (-(-D // lane) * lane) * itemsize
    # Keep the scoped VMEM limit generation-safe (v7x has only 64 MiB/TC).
    vmem_limit = int(min(48 * 1024 * 1024,
                         max(32 * 1024 * 1024,
                             (x_buffers + 1) * x_tile_bytes + 8 * 1024 * 1024)))

    x_spec_kwargs = {}
    if x_buffers != 2:
        # Optional deeper pipelining (e.g. v5e, if profiling shows exposed DMA).
        x_spec_kwargs["pipeline_mode"] = pl.Buffered(x_buffers)
    x_spec = pl.BlockSpec((1, tile_n, S, D), lambda b, n: (b, n, 0, 0),
                          **x_spec_kwargs)

    cost = pl.CostEstimate(
        flops=int(4 * B * N * S * D * D          # K and V projections
                  + 4 * B * N * S * D * H        # per-head logits + head broadcast
                  + 8 * B * N * S * D),          # elementwise online-softmax pooling
        transcendentals=int(B * N * S * H),
        bytes_accessed=int(x_c.size * x_c.dtype.itemsize
                           + B * S * D * 4
                           + (2 * D * D + 2 * D + S * D + 2 * D * H) * 4),
    )

    pooled = pl.pallas_call(
        pma_pool_kernel,
        out_shape=jax.ShapeDtypeStruct((B, S, D), jnp.float32),
        grid=(B, n_tiles),
        in_specs=[
            x_spec,                                                   # X (streamed)
            pl.BlockSpec((S, D), lambda b, n: (0, 0)),                # M
            pl.BlockSpec((D, D), lambda b, n: (0, 0)),                # Wk
            pl.BlockSpec((1, D), lambda b, n: (0, 0)),                # bk
            pl.BlockSpec((D, D), lambda b, n: (0, 0)),                # Wv
            pl.BlockSpec((1, D), lambda b, n: (0, 0)),                # bv
            pl.BlockSpec((D, H), lambda b, n: (0, 0)),                # e (scaled)
            pl.BlockSpec((H, D), lambda b, n: (0, 0)),                # et
        ],
        out_specs=pl.BlockSpec((1, S, D), lambda b, n: (b, 0, 0)),
        scratch_shapes=[
            pltpu.VMEM((S, H), jnp.float32),   # running max
            pltpu.VMEM((S, H), jnp.float32),   # running softmax denominator
            pltpu.VMEM((S, D), jnp.float32),   # running weighted-V accumulator
        ],
        compiler_params=pltpu.CompilerParams(
            dimension_semantics=("parallel", "arbitrary"),   # batch // megacore, N = reduction
            vmem_limit_bytes=vmem_limit,
        ),
        cost_estimate=cost,
    )(x_c, m_f, wk_c, bk2, wv_c, bv2, e, et)

    # --- Tail: BN0 -> fc_o + ReLU residual -> BN1, gridded over the seed axis.
    # (S, B, D) layout keeps every tail block full in its last two dims.
    pooled_t = jnp.transpose(pooled, (1, 0, 2))                    # (S, B, D)
    wo_f = wo.astype(jnp.float32)                                  # (D, D)
    bo2 = bo.reshape(1, D).astype(jnp.float32)
    g0r = g0.astype(jnp.float32).reshape(S, 1, D)
    b0r = b0.astype(jnp.float32).reshape(S, 1, D)
    g1r = g1.astype(jnp.float32).reshape(S, 1, D)
    b1r = b1.astype(jnp.float32).reshape(S, 1, D)

    out_t = pl.pallas_call(
        pma_tail_kernel,
        out_shape=jax.ShapeDtypeStruct((S, B, D), jnp.float32),
        grid=(S,),
        in_specs=[
            pl.BlockSpec((1, B, D), lambda s: (s, 0, 0)),             # pooled slice
            pl.BlockSpec((D, D), lambda s: (0, 0)),                   # Wo
            pl.BlockSpec((1, D), lambda s: (0, 0)),                   # bo
            pl.BlockSpec((1, 1, D), lambda s: (s, 0, 0)),             # gamma0
            pl.BlockSpec((1, 1, D), lambda s: (s, 0, 0)),             # beta0
            pl.BlockSpec((1, 1, D), lambda s: (s, 0, 0)),             # gamma1
            pl.BlockSpec((1, 1, D), lambda s: (s, 0, 0)),             # beta1
        ],
        out_specs=pl.BlockSpec((1, B, D), lambda s: (s, 0, 0)),
        compiler_params=pltpu.CompilerParams(
            dimension_semantics=("parallel",),
        ),
    )(pooled_t, wo_f, bo2, g0r, b0r, g1r, b1r)

    return jnp.transpose(out_t, (1, 0, 2))                         # (B, S, D)


# ----------------------------------------------------------------------------
# Pure-JAX reference (transliteration of the PyTorch forward, weights (in, out))
# ----------------------------------------------------------------------------
def pma_reference(x, m, wk, bk, wv, bv, wo, bo, g0, b0, g1, b1, num_heads):
    B, N, S, D = x.shape
    H = num_heads
    eps = 1e-5
    K = x @ wk + bk
    V = x @ wv + bv
    Mr = jnp.broadcast_to(m[None], (B, S, D))
    M_ = jnp.concatenate(jnp.split(Mr, H, axis=2), axis=0)       # (B*H, S, ds)
    K_ = jnp.concatenate(jnp.split(K, H, axis=3), axis=0)        # (B*H, N, S, ds)
    V_ = jnp.concatenate(jnp.split(V, H, axis=3), axis=0)
    Sc = jnp.matmul(jnp.swapaxes(K_, 1, 2), M_[..., None])       # (B*H, S, N, 1)
    Sc = jnp.swapaxes(Sc, 1, 2)                                  # (B*H, N, S, 1)
    A = jax.nn.softmax(Sc / math.sqrt(D), axis=1)
    O_ = M_ + jnp.sum(A * V_, axis=1)                            # (B*H, S, ds)
    O = jnp.concatenate(jnp.split(O_, H, axis=0), axis=2)        # (B, S, D)

    Of = O.reshape(B, S * D)
    mu = Of.mean(0)
    var = ((Of - mu) ** 2).mean(0)
    Of = (Of - mu) / jnp.sqrt(var + eps) * g0 + b0
    O = Of.reshape(B, S, D)

    O = O + jax.nn.relu(O @ wo + bo)

    Of = O.reshape(B, S * D)
    mu = Of.mean(0)
    var = ((Of - mu) ** 2).mean(0)
    Of = (Of - mu) / jnp.sqrt(var + eps) * g1 + b1
    return Of.reshape(B, S, D)


if __name__ == "__main__":
    # batch, set size, num_seeds, dim, num_heads; tile_n=8 -> 2 N-tiles so the
    # streamed online-softmax path is actually exercised.
    B, N, S, D, H = 4, 16, 8, 32, 4
    tile_n = 8

    key = jax.random.PRNGKey(0)
    ks = jax.random.split(key, 8)

    bound_m = math.sqrt(6.0 / (S * D))
    m = jax.random.uniform(ks[0], (S, D), jnp.float32, -bound_m, bound_m)
    bl = 1.0 / math.sqrt(D)
    wk = jax.random.uniform(ks[1], (D, D), jnp.float32, -bl, bl)
    bk = jax.random.uniform(ks[2], (D,), jnp.float32, -bl, bl)
    wv = jax.random.uniform(ks[3], (D, D), jnp.float32, -bl, bl)
    bv = jax.random.uniform(ks[4], (D,), jnp.float32, -bl, bl)
    wo = jax.random.uniform(ks[5], (D, D), jnp.float32, -bl, bl)
    bo = jax.random.uniform(ks[6], (D,), jnp.float32, -bl, bl)
    g0 = jnp.ones((S * D,), jnp.float32)
    b0 = jnp.zeros((S * D,), jnp.float32)
    g1 = jnp.ones((S * D,), jnp.float32)
    b1 = jnp.zeros((S * D,), jnp.float32)

    x = jax.random.normal(ks[7], (B, N, S, D), jnp.float32)

    ref = pma_reference(x, m, wk, bk, wv, bv, wo, bo, g0, b0, g1, b1, H)

    # Full-precision compute path: exact-reciprocal finalize keeps this within a
    # tight tolerance of the reference even after BatchNorm amplification.
    out = pma_forward(x, m, wk, bk, wv, bv, wo, bo, g0, b0, g1, b1, H,
                      tile_n=tile_n, compute_dtype=jnp.float32)
    out = jax.block_until_ready(out)
    assert out.shape == (B, S, D), out.shape
    err = float(jnp.max(jnp.abs(out - ref)))
    assert jnp.allclose(out, ref, rtol=2e-3, atol=2e-3), err

    # Default bf16-X path (halves the HBM stream) with auto-sized N tiles:
    # sanity-check only, since the two BatchNorms amplify bf16 input rounding
    # by 1/(per-feature batch std) and make a tight numeric bound shape-dependent.
    out_bf = jax.block_until_ready(
        pma_forward(x, m, wk, bk, wv, bv, wo, bo, g0, b0, g1, b1, H))
    assert out_bf.shape == (B, S, D), out_bf.shape
    assert bool(jnp.all(jnp.isfinite(out_bf)))

    print("KERNEL_OK")
</pallas_src>

<mosaic_0001>
module attributes {stable_mosaic.version = 11 : i64} {
  func.func @pma_pool_kernel(%arg0: i32, %arg1: i32, %arg2: memref<1x8x8x32xf32, #tpu.memory_space<vmem>>, %arg3: memref<8x32xf32, #tpu.memory_space<vmem>>, %arg4: memref<32x32xf32, #tpu.memory_space<vmem>>, %arg5: memref<1x32xf32, #tpu.memory_space<vmem>>, %arg6: memref<32x32xf32, #tpu.memory_space<vmem>>, %arg7: memref<1x32xf32, #tpu.memory_space<vmem>>, %arg8: memref<32x4xf32, #tpu.memory_space<vmem>>, %arg9: memref<4x32xf32, #tpu.memory_space<vmem>>, %arg10: memref<1x8x32xf32, #tpu.memory_space<vmem>>, %arg11: memref<8x4xf32, #tpu.memory_space<vmem>>, %arg12: memref<8x4xf32, #tpu.memory_space<vmem>>, %arg13: memref<8x32xf32, #tpu.memory_space<vmem>>) attributes {dimension_semantics = [#tpu.dimension_semantics<parallel>, #tpu.dimension_semantics<arbitrary>], iteration_bounds = array<i64: 4, 2>, scalar_prefetch = 0 : i64, scratch_operands = 3 : i64, tpu.core_type = #tpu.core_type<tc>, window_params = [{transform_indices = @transform_0, window_bounds = array<i64: 1, 8, 8, 32>}, {pipeline_mode = #tpu.pipeline_mode<synchronous>, transform_indices = @transform_1, window_bounds = array<i64: 8, 32>}, {pipeline_mode = #tpu.pipeline_mode<synchronous>, transform_indices = @transform_2, window_bounds = array<i64: 32, 32>}, {pipeline_mode = #tpu.pipeline_mode<synchronous>, transform_indices = @transform_3, window_bounds = array<i64: 1, 32>}, {pipeline_mode = #tpu.pipeline_mode<synchronous>, transform_indices = @transform_4, window_bounds = array<i64: 32, 32>}, {pipeline_mode = #tpu.pipeline_mode<synchronous>, transform_indices = @transform_5, window_bounds = array<i64: 1, 32>}, {pipeline_mode = #tpu.pipeline_mode<synchronous>, transform_indices = @transform_6, window_bounds = array<i64: 32, 4>}, {pipeline_mode = #tpu.pipeline_mode<synchronous>, transform_indices = @transform_7, window_bounds = array<i64: 4, 32>}, {transform_indices = @transform_8, window_bounds = array<i64: 1, 8, 32>}]} {
    %c0_i32 = arith.constant 0 : i32
    %0 = arith.cmpi eq, %arg1, %c0_i32 : i32
    %1 = arith.extui %0 : i1 to i32
    %c0_i32_0 = arith.constant 0 : i32
    %2 = arith.cmpi ne, %1, %c0_i32_0 : i32
    scf.if %2 {
      %cst_40 = arith.constant 0xFF800000 : f32
      %56 = vector.broadcast %cst_40 : f32 to vector<8x4xf32>
      %c0_41 = arith.constant 0 : index
      %c0_42 = arith.constant 0 : index
      %57 = vector.load %arg11[%c0_41, %c0_42] : memref<8x4xf32, #tpu.memory_space<vmem>>, vector<8x4xf32>
      tpu.vector_store %arg11[%c0_41, %c0_42], %56 {strides = array<i32>} : memref<8x4xf32, #tpu.memory_space<vmem>>, vector<8x4xf32>,
      %cst_43 = arith.constant 0.000000e+00 : f32
      %58 = vector.broadcast %cst_43 : f32 to vector<8x4xf32>
      %c0_44 = arith.constant 0 : index
      %c0_45 = arith.constant 0 : index
      %59 = vector.load %arg12[%c0_44, %c0_45] : memref<8x4xf32, #tpu.memory_space<vmem>>, vector<8x4xf32>
      tpu.vector_store %arg12[%c0_44, %c0_45], %58 {strides = array<i32>} : memref<8x4xf32, #tpu.memory_space<vmem>>, vector<8x4xf32>,
      %cst_46 = arith.constant 0.000000e+00 : f32
      %60 = vector.broadcast %cst_46 : f32 to vector<8x32xf32>
      %c0_47 = arith.constant 0 : index
      %c0_48 = arith.constant 0 : index
      %61 = vector.load %arg13[%c0_47, %c0_48] : memref<8x32xf32, #tpu.memory_space<vmem>>, vector<8x32xf32>
      tpu.vector_store %arg13[%c0_47, %c0_48], %60 {strides = array<i32>} : memref<8x32xf32, #tpu.memory_space<vmem>>, vector<8x32xf32>,
    } else {
    }
    %c0 = arith.constant 0 : index
    %c0_1 = arith.constant 0 : index
    %c0_2 = arith.constant 0 : index
    %c0_3 = arith.constant 0 : index
    %3 = vector.load %arg2[%c0, %c0_1, %c0_2, %c0_3] : memref<1x8x8x32xf32, #tpu.memory_space<vmem>>, vector<1x8x8x32xf32>
    %4 = vector.shape_cast %3 : vector<1x8x8x32xf32> to vector<8x8x32xf32>
    %5 = vector.shape_cast %4 : vector<8x8x32xf32> to vector<64x32xf32>
    %c0_4 = arith.constant 0 : index
    %c0_5 = arith.constant 0 : index
    %6 = vector.load %arg4[%c0_4, %c0_5] : memref<32x32xf32, #tpu.memory_space<vmem>>, vector<32x32xf32>
    %cst = arith.constant dense<0.000000e+00> : vector<64x32xf32>
    %7 = tpu.matmul %5, %6, %cst {dimension_numbers = #tpu.dot_dimension_numbers<[1], [0], [0], [1], [0, 0, 1, 1], [], []>} : vector<64x32xf32>, vector<32x32xf32>, vector<64x32xf32> -> vector<64x32xf32>
    %c0_6 = arith.constant 0 : index
    %c0_7 = arith.constant 0 : index
    %8 = vector.load %arg5[%c0_6, %c0_7] : memref<1x32xf32, #tpu.memory_space<vmem>>, vector<1x32xf32>
    %9 = vector.broadcast %8 : vector<1x32xf32> to vector<64x32xf32>
    %10 = arith.addf %7, %9 : vector<64x32xf32>
    %11 = vector.shape_cast %10 : vector<64x32xf32> to vector<8x8x32xf32>
    %c0_8 = arith.constant 0 : index
    %c0_9 = arith.constant 0 : index
    %12 = vector.load %arg6[%c0_8, %c0_9] : memref<32x32xf32, #tpu.memory_space<vmem>>, vector<32x32xf32>
    %cst_10 = arith.constant dense<0.000000e+00> : vector<64x32xf32>
    %13 = tpu.matmul %5, %12, %cst_10 {dimension_numbers = #tpu.dot_dimension_numbers<[1], [0], [0], [1], [0, 0, 1, 1], [], []>} : vector<64x32xf32>, vector<32x32xf32>, vector<64x32xf32> -> vector<64x32xf32>
    %c0_11 = arith.constant 0 : index
    %c0_12 = arith.constant 0 : index
    %14 = vector.load %arg7[%c0_11, %c0_12] : memref<1x32xf32, #tpu.memory_space<vmem>>, vector<1x32xf32>
    %15 = vector.broadcast %14 : vector<1x32xf32> to vector<64x32xf32>
    %16 = arith.addf %13, %15 : vector<64x32xf32>
    %17 = vector.shape_cast %16 : vector<64x32xf32> to vector<8x8x32xf32>
    %c0_13 = arith.constant 0 : index
    %c0_14 = arith.constant 0 : index
    %18 = vector.load %arg3[%c0_13, %c0_14] : memref<8x32xf32, #tpu.memory_space<vmem>>, vector<8x32xf32>
    %c0_15 = arith.constant 0 : index
    %c0_16 = arith.constant 0 : index
    %19 = vector.load %arg8[%c0_15, %c0_16] : memref<32x4xf32, #tpu.memory_space<vmem>>, vector<32x4xf32>
    %c0_17 = arith.constant 0 : index
    %c0_18 = arith.constant 0 : index
    %20 = vector.load %arg9[%c0_17, %c0_18] : memref<4x32xf32, #tpu.memory_space<vmem>>, vector<4x32xf32>
    %21 = vector.shape_cast %18 : vector<8x32xf32> to vector<1x8x32xf32>
    %22 = vector.broadcast %21 : vector<1x8x32xf32> to vector<8x8x32xf32>
    %23 = arith.mulf %11, %22 : vector<8x8x32xf32>
    %24 = vector.shape_cast %23 : vector<8x8x32xf32> to vector<64x32xf32>
    %cst_19 = arith.constant dense<0.000000e+00> : vector<64x4xf32>
    %25 = tpu.matmul %24, %19, %cst_19 {dimension_numbers = #tpu.dot_dimension_numbers<[1], [0], [0], [1], [0, 0, 1, 1], [], []>} : vector<64x32xf32>, vector<32x4xf32>, vector<64x4xf32> -> vector<64x4xf32>
    %26 = vector.shape_cast %25 : vector<64x4xf32> to vector<8x8x4xf32>
    %c0_20 = arith.constant 0 : index
    %c0_21 = arith.constant 0 : index
    %27 = vector.load %arg11[%c0_20, %c0_21] : memref<8x4xf32, #tpu.memory_space<vmem>>, vector<8x4xf32>
    %cst_22 = arith.constant dense<0xFF800000> : vector<8x4xf32>
    %28 = vector.multi_reduction <maximumf>, %26, %cst_22 [0] : vector<8x8x4xf32> to vector<8x4xf32>
    %29 = arith.maximumf %27, %28 : vector<8x4xf32>
    %c0_23 = arith.constant 0 : index
    %c0_24 = arith.constant 0 : index
    %30 = vector.load %arg11[%c0_23, %c0_24] : memref<8x4xf32, #tpu.memory_space<vmem>>, vector<8x4xf32>
    %31 = arith.subf %30, %29 : vector<8x4xf32>
    %32 = math.exp %31 : vector<8x4xf32>
    %33 = vector.shape_cast %29 : vector<8x4xf32> to vector<1x8x4xf32>
    %34 = vector.broadcast %33 : vector<1x8x4xf32> to vector<8x8x4xf32>
    %35 = arith.subf %26, %34 : vector<8x8x4xf32>
    %36 = math.exp %35 : vector<8x8x4xf32>
    %c0_25 = arith.constant 0 : index
    %c0_26 = arith.constant 0 : index
    %37 = vector.load %arg12[%c0_25, %c0_26] : memref<8x4xf32, #tpu.memory_space<vmem>>, vector<8x4xf32>
    %38 = arith.mulf %32, %37 : vector<8x4xf32>
    %cst_27 = arith.constant dense<0.000000e+00> : vector<8x4xf32>
    %39 = vector.multi_reduction <add>, %36, %cst_27 [0] : vector<8x8x4xf32> to vector<8x4xf32>
    %40 = arith.addf %38, %39 : vector<8x4xf32>
    %c0_28 = arith.constant 0 : index
    %c0_29 = arith.constant 0 : index
    %41 = vector.load %arg12[%c0_28, %c0_29] : memref<8x4xf32, #tpu.memory_space<vmem>>, vector<8x4xf32>
    tpu.vector_store %arg12[%c0_28, %c0_29], %40 {strides = array<i32>} : memref<8x4xf32, #tpu.memory_space<vmem>>, vector<8x4xf32>,
    %42 = vector.shape_cast %36 : vector<8x8x4xf32> to vector<64x4xf32>
    %cst_30 = arith.constant dense<0.000000e+00> : vector<64x32xf32>
    %43 = tpu.matmul %42, %20, %cst_30 {dimension_numbers = #tpu.dot_dimension_numbers<[1], [0], [0], [1], [0, 0, 1, 1], [], []>} : vector<64x4xf32>, vector<4x32xf32>, vector<64x32xf32> -> vector<64x32xf32>
    %44 = vector.shape_cast %43 : vector<64x32xf32> to vector<8x8x32xf32>
    %cst_31 = arith.constant dense<0.000000e+00> : vector<8x32xf32>
    %45 = tpu.matmul %32, %20, %cst_31 {dimension_numbers = #tpu.dot_dimension_numbers<[1], [0], [0], [1], [0, 0, 1, 1], [], []>} : vector<8x4xf32>, vector<4x32xf32>, vector<8x32xf32> -> vector<8x32xf32>
    %c0_32 = arith.constant 0 : index
    %c0_33 = arith.constant 0 : index
    %46 = vector.load %arg13[%c0_32, %c0_33] : memref<8x32xf32, #tpu.memory_space<vmem>>, vector<8x32xf32>
    %47 = arith.mulf %45, %46 : vector<8x32xf32>
    %48 = arith.mulf %44, %17 : vector<8x8x32xf32>
    %cst_34 = arith.constant dense<0.000000e+00> : vector<8x32xf32>
    %49 = vector.multi_reduction <add>, %48, %cst_34 [0] : vector<8x8x32xf32> to vector<8x32xf32>
    %50 = arith.addf %47, %49 : vector<8x32xf32>
    %c0_35 = arith.constant 0 : index
    %c0_36 = arith.constant 0 : index
    %51 = vector.load %arg13[%c0_35, %c0_36] : memref<8x32xf32, #tpu.memory_space<vmem>>, vector<8x32xf32>
    tpu.vector_store %arg13[%c0_35, %c0_36], %50 {strides = array<i32>} : memref<8x32xf32, #tpu.memory_space<vmem>>, vector<8x32xf32>,
    %c0_37 = arith.constant 0 : index
    %c0_38 = arith.constant 0 : index
    %52 = vector.load %arg11[%c0_37, %c0_38] : memref<8x4xf32, #tpu.memory_space<vmem>>, vector<8x4xf32>
    tpu.vector_store %arg11[%c0_37, %c0_38], %29 {strides = array<i32>} : memref<8x4xf32, #tpu.memory_space<vmem>>, vector<8x4xf32>,
    %c1_i32 = arith.constant 1 : i32
    %53 = arith.cmpi eq, %arg1, %c1_i32 : i32
    %54 = arith.extui %53 : i1 to i32
    %c0_i32_39 = arith.constant 0 : i32
    %55 = arith.cmpi ne, %54, %c0_i32_39 : i32
    scf.if %55 {
      %c0_40 = arith.constant 0 : index
      %c0_41 = arith.constant 0 : index
      %56 = vector.load %arg12[%c0_40, %c0_41] : memref<8x4xf32, #tpu.memory_space<vmem>>, vector<8x4xf32>
      %cst_42 = arith.constant dense<0.000000e+00> : vector<8x32xf32>
      %57 = tpu.matmul %56, %20, %cst_42 {dimension_numbers = #tpu.dot_dimension_numbers<[1], [0], [0], [1], [0, 0, 1, 1], [], []>} : vector<8x4xf32>, vector<4x32xf32>, vector<8x32xf32> -> vector<8x32xf32>
      %c0_43 = arith.constant 0 : index
      %c0_44 = arith.constant 0 : index
      %58 = vector.load %arg13[%c0_43, %c0_44] : memref<8x32xf32, #tpu.memory_space<vmem>>, vector<8x32xf32>
      %59 = arith.divf %58, %57 : vector<8x32xf32>
      %60 = arith.addf %18, %59 : vector<8x32xf32>
      %c0_45 = arith.constant 0 : index
      %c0_46 = arith.constant 0 : index
      %c0_47 = arith.constant 0 : index
      %61 = vector.load %arg10[%c0_45, %c0_46, %c0_47] : memref<1x8x32xf32, #tpu.memory_space<vmem>>, vector<1x8x32xf32>
      %62 = vector.shape_cast %61 : vector<1x8x32xf32> to vector<8x32xf32>
      %63 = vector.shape_cast %60 : vector<8x32xf32> to vector<1x8x32xf32>
      tpu.vector_store %arg10[%c0_45, %c0_46, %c0_47], %63 {strides = array<i32>} : memref<1x8x32xf32, #tpu.memory_space<vmem>>, vector<1x8x32xf32>,
    } else {
    }
    return
  }
  func.func @transform_0(%arg0: i32, %arg1: i32) -> (i32, i32, i32, i32) {
    %c0_i32 = arith.constant 0 : i32
    %c0_i32_0 = arith.constant 0 : i32
    %c0_i32_1 = arith.constant 0 : i32
    return %arg0, %arg1, %c0_i32, %c0_i32_0 : i32, i32, i32, i32
  }
  func.func @transform_1(%arg0: i32, %arg1: i32) -> (i32, i32) {
    %c0_i32 = arith.constant 0 : i32
    %c0_i32_0 = arith.constant 0 : i32
    %c0_i32_1 = arith.constant 0 : i32
    return %c0_i32, %c0_i32_0 : i32, i32
  }
  func.func @transform_2(%arg0: i32, %arg1: i32) -> (i32, i32) {
    %c0_i32 = arith.constant 0 : i32
    %c0_i32_0 = arith.constant 0 : i32
    %c0_i32_1 = arith.constant 0 : i32
    return %c0_i32, %c0_i32_0 : i32, i32
  }
  func.func @transform_3(%arg0: i32, %arg1: i32) -> (i32, i32) {
    %c0_i32 = arith.constant 0 : i32
    %c0_i32_0 = arith.constant 0 : i32
    %c0_i32_1 = arith.constant 0 : i32
    return %c0_i32, %c0_i32_0 : i32, i32
  }
  func.func @transform_4(%arg0: i32, %arg1: i32) -> (i32, i32) {
    %c0_i32 = arith.constant 0 : i32
    %c0_i32_0 = arith.constant 0 : i32
    %c0_i32_1 = arith.constant 0 : i32
    return %c0_i32, %c0_i32_0 : i32, i32
  }
  func.func @transform_5(%arg0: i32, %arg1: i32) -> (i32, i32) {
    %c0_i32 = arith.constant 0 : i32
    %c0_i32_0 = arith.constant 0 : i32
    %c0_i32_1 = arith.constant 0 : i32
    return %c0_i32, %c0_i32_0 : i32, i32
  }
  func.func @transform_6(%arg0: i32, %arg1: i32) -> (i32, i32) {
    %c0_i32 = arith.constant 0 : i32
    %c0_i32_0 = arith.constant 0 : i32
    %c0_i32_1 = arith.constant 0 : i32
    return %c0_i32, %c0_i32_0 : i32, i32
  }
  func.func @transform_7(%arg0: i32, %arg1: i32) -> (i32, i32) {
    %c0_i32 = arith.constant 0 : i32
    %c0_i32_0 = arith.constant 0 : i32
    %c0_i32_1 = arith.constant 0 : i32
    return %c0_i32, %c0_i32_0 : i32, i32
  }
  func.func @transform_8(%arg0: i32, %arg1: i32) -> (i32, i32, i32) {
    %c0_i32 = arith.constant 0 : i32
    %c0_i32_0 = arith.constant 0 : i32
    %c0_i32_1 = arith.constant 0 : i32
    return %arg0, %c0_i32, %c0_i32_0 : i32, i32, i32
  }
}

</mosaic_0001>

<llo_original>
// kernel: tpu_custom_call.1
$region0: #{tpu_custom_call.1}
  #allocation0 [shape = 'u32[]', space=smem, size = 0x4, offset = 0x4, fixed_abs, tag = 'smem constant byte address 0x4 - core index']
  #allocation1 [shape = 'u32[144,128]{1,0:T(1,128)}', space=vmem, size = 0x12000, scoped, tag = 'internal scratch']
  #allocation2 [shape = 'f32[8,4]{1,0:T(8,128)}', space=vmem, size = 0x1000, scoped, tag = 'scratch operand']
  #allocation3 [shape = 'f32[8,4]{1,0:T(8,128)}', space=vmem, size = 0x1000, scoped, tag = 'scratch operand']
  #allocation4 [shape = 'f32[8,32]{1,0:T(8,128)}', space=vmem, size = 0x1000, scoped, tag = 'scratch operand']
  %s0 = inlined_call_operand.hbm [shape: f32[4,16,8,32], index: 0, kind: input, shape index: {}]
  %s1 = inlined_call_operand.vmem [shape: f32[8,32], index: 1, kind: input, shape index: {}]
  %s2 = inlined_call_operand.vmem [shape: f32[32,32], index: 2, kind: input, shape index: {}]
  %s3 = inlined_call_operand.vmem [shape: f32[1,32], index: 3, kind: input, shape index: {}]
  %s4 = inlined_call_operand.hbm [shape: f32[32,32], index: 4, kind: input, shape index: {}]
  %s5 = inlined_call_operand.vmem [shape: f32[1,32], index: 5, kind: input, shape index: {}]
  %s6 = inlined_call_operand.vmem [shape: f32[32,4], index: 6, kind: input, shape index: {}]
  %s7 = inlined_call_operand.vmem [shape: f32[4,32], index: 7, kind: input, shape index: {}]
  %s8 = inlined_call_operand.hbm [shape: f32[4,8,32], index: 8, kind: output, shape index: {}]
  %s9 = sld [smem:[#allocation0]]
  $region81: #{tpu_custom_call.1} parent=0
    _
  %s11 = ssub.s32 1, %s9
  %s12 = scalar_select 0, %s11, %s9
  $region1: #{tpu_custom_call.1} parent=0
    #allocation5 [shape = 'u8[65536]{0}', space=vmem, size = 0x10000, scoped, tag = 'input window, operand 0']
    #allocation6 [shape = 's32[2]{0}', space=sflag, size = 0x8, scoped, tag = 'scoped memory for tpu_custom_call.1']
    #allocation7 [shape = 's32[2]{0}', space=sflag, size = 0x8, scoped, tag = 'scoped memory for tpu_custom_call.1']
    #allocation8 [shape = 'u8[16384]{0}', space=vmem, size = 0x4000, scoped, tag = 'input window, operand 4, single buffered']
    #allocation9 [shape = 's32[1]{0}', space=sflag, size = 0x4, scoped, tag = 'scoped memory for tpu_custom_call.1']
    #allocation10 [shape = 'u8[8192]{0}', space=vmem, size = 0x2000, scoped, tag = 'output window, operand 0']
    %13 = vsyncpa [#allocation6], 0
    %s14 = scalar_lea.sflag [#allocation6], 1
    %15 = vsyncpa %s14, 0
    %16 = vsyncpa [#allocation9], 0
    %17 = vsyncpa [#allocation7], 0
    %s18 = scalar_lea.sflag [#allocation7], 1
    %19 = vsyncpa %s18, 0
    loop: start=0, step=1, limit=10
    $region2: #{tpu_custom_call.1} parent=1 // loop_pre_header
      _
    $region3: #{tpu_custom_call.1} parent=1 // loop_header
      %s21 = sphi 0, %s25
      %p22 = scmp.ge.s32.totalorder %s21, 10
      %s28 = sphi 0, %s40
      %s29 = sphi 0, %s36
      %s30 = sphi 0, %s28
      %s31 = sphi 0, %s29
      %s32 = sphi 0, %s30
      %s33 = sphi 0, %s31
      %s45 = sphi 0, %s47
      %s48 = sphi 0, %s45
      %s49 = sphi 0, %s48
      %s65 = sphi 0, %s49
      %s69 = sphi 0, %s69
      %s71 = sphi 0, %s69
      %s72 = sphi 0, %s71
      %s86 = sphi 0, %s72
      %s90 = sphi 0, %s90
      %s92 = sphi 0, %s90
      %s93 = sphi 0, %s92
      %s107 = sphi 0, %s93
      %s111 = sphi 0, %s111
      %s113 = sphi 0, %s111
      %s114 = sphi 0, %s113
      %s128 = sphi 0, %s114
      %s132 = sphi 0, %s132
      %s134 = sphi 0, %s132
      %s135 = sphi 0, %s134
      %s149 = sphi 0, %s135
      %s153 = sphi 0, %s153
      %s155 = sphi 0, %s153
      %s156 = sphi 0, %s155
      %s170 = sphi 0, %s156
      %s174 = sphi 0, %s174
      %s176 = sphi 0, %s174
      %s177 = sphi 0, %s176
      %s191 = sphi 0, %s177
      %s195 = sphi 0, %s195
      %s197 = sphi 0, %s195
      %s198 = sphi 0, %s197
      %s212 = sphi 0, %s198
      %s218 = sphi 0, %s220
      %s221 = sphi 0, %s218
      %s222 = sphi 0, %s221
      %s238 = sphi 0, %s222
    $region4: #{tpu_custom_call.1} parent=1 // loop_header_branch
      %24 = sbr.rel (%p22) target = $region8
    $region5: #{tpu_custom_call.1} parent=1 // loop_body
      %s26 = ssub.s32 %s21, 1
      %s27 = ssub.s32 %s21, 2
      %s34 = sadd.s32 1, %s29
      %p35 = scmp.ge.s32.totalorder %s34, 2
      %s36 = scalar_select %p35, 0, %s34
      %s37 = sadd.s32 1, %s28
      %s38 = scalar_select %p35, %s37, %s28
      %p39 = scmp.ge.s32.totalorder %s38, 4
      %s40 = scalar_select %p39, 0, %s38
      %s41 = ssub.s32 %s28, %s40
      %s42 = ssub.s32 %s29, %s36
      %s43 = sor.u32 %s41, %s42
      %p44 = scmp.eq.s32.totalorder %s43, 0
      %s46 = sadd.s32 %s45, 1
      %s47 = scalar_select %p44, %s45, %s46
      %p50 = pneg %p44
      %p51 = scmp.eq.s32.totalorder %s21, 7
      %p52 = por %p50, %p51
      %p53 = scmp.ne.s32.totalorder %s45, %s48
      %p54 = scmp.eq.s32.totalorder %s21, 0
      %p55 = por %p53, %p54
      %p56 = scmp.ne.s32.totalorder %s45, %s48
      %p57 = scmp.eq.s32.totalorder %s26, 7
      %p58 = por %p56, %p57
      %p59 = scmp.ne.s32.totalorder %s48, %s49
      %p60 = scmp.eq.s32.totalorder %s26, 0
      %p61 = por %p59, %p60
      %p62 = scmp.ne.s32.totalorder %s48, %s49
      %p63 = scmp.eq.s32.totalorder %s27, 7
      %p64 = por %p62, %p63
      %p66 = scmp.ne.s32.totalorder %s49, %s65
      %p67 = scmp.eq.s32.totalorder %s27, 0
      %p68 = por %p66, %p67
      %s70 = sadd.s32 %s69, 1
      %p73 = scmp.eq.s32.totalorder %s21, 7
      %p74 = scmp.ne.s32.totalorder %s69, %s71
      %p75 = scmp.eq.s32.totalorder %s21, 0
      %p76 = por %p74, %p75
      %p77 = scmp.ne.s32.totalorder %s69, %s71
      %p78 = scmp.eq.s32.totalorder %s26, 7
      %p79 = por %p77, %p78
      %p80 = scmp.ne.s32.totalorder %s71, %s72
      %p81 = scmp.eq.s32.totalorder %s26, 0
      %p82 = por %p80, %p81
      %p83 = scmp.ne.s32.totalorder %s71, %s72
      %p84 = scmp.eq.s32.totalorder %s27, 7
      %p85 = por %p83, %p84
      %p87 = scmp.ne.s32.totalorder %s72, %s86
      %p88 = scmp.eq.s32.totalorder %s27, 0
      %p89 = por %p87, %p88
      %s91 = sadd.s32 %s90, 1
      %p94 = scmp.eq.s32.totalorder %s21, 7
      %p95 = scmp.ne.s32.totalorder %s90, %s92
      %p96 = scmp.eq.s32.totalorder %s21, 0
      %p97 = por %p95, %p96
      %p98 = scmp.ne.s32.totalorder %s90, %s92
      %p99 = scmp.eq.s32.totalorder %s26, 7
      %p100 = por %p98, %p99
      %p101 = scmp.ne.s32.totalorder %s92, %s93
      %p102 = scmp.eq.s32.totalorder %s26, 0
      %p103 = por %p101, %p102
      %p104 = scmp.ne.s32.totalorder %s92, %s93
      %p105 = scmp.eq.s32.totalorder %s27, 7
      %p106 = por %p104, %p105
      %p108 = scmp.ne.s32.totalorder %s93, %s107
      %p109 = scmp.eq.s32.totalorder %s27, 0
      %p110 = por %p108, %p109
      %s112 = sadd.s32 %s111, 1
      %p115 = scmp.eq.s32.totalorder %s21, 7
      %p116 = scmp.ne.s32.totalorder %s111, %s113
      %p117 = scmp.eq.s32.totalorder %s21, 0
      %p118 = por %p116, %p117
      %p119 = scmp.ne.s32.totalorder %s111, %s113
      %p120 = scmp.eq.s32.totalorder %s26, 7
      %p121 = por %p119, %p120
      %p122 = scmp.ne.s32.totalorder %s113, %s114
      %p123 = scmp.eq.s32.totalorder %s26, 0
      %p124 = por %p122, %p123
      %p125 = scmp.ne.s32.totalorder %s113, %s114
      %p126 = scmp.eq.s32.totalorder %s27, 7
      %p127 = por %p125, %p126
      %p129 = scmp.ne.s32.totalorder %s114, %s128
      %p130 = scmp.eq.s32.totalorder %s27, 0
      %p131 = por %p129, %p130
      %s133 = sadd.s32 %s132, 1
      %p136 = scmp.eq.s32.totalorder %s21, 7
      %p137 = scmp.ne.s32.totalorder %s132, %s134
      %p138 = scmp.eq.s32.totalorder %s21, 0
      %p139 = por %p137, %p138
      %p140 = scmp.ne.s32.totalorder %s132, %s134
      %p141 = scmp.eq.s32.totalorder %s26, 7
      %p142 = por %p140, %p141
      %p143 = scmp.ne.s32.totalorder %s134, %s135
      %p144 = scmp.eq.s32.totalorder %s26, 0
      %p145 = por %p143, %p144
      %p146 = scmp.ne.s32.totalorder %s134, %s135
      %p147 = scmp.eq.s32.totalorder %s27, 7
      %p148 = por %p146, %p147
      %p150 = scmp.ne.s32.totalorder %s135, %s149
      %p151 = scmp.eq.s32.totalorder %s27, 0
      %p152 = por %p150, %p151
      %s154 = sadd.s32 %s153, 1
      %p157 = scmp.eq.s32.totalorder %s21, 7
      %p158 = scmp.ne.s32.totalorder %s153, %s155
      %p159 = scmp.eq.s32.totalorder %s21, 0
      %p160 = por %p158, %p159
      %p161 = scmp.ne.s32.totalorder %s153, %s155
      %p162 = scmp.eq.s32.totalorder %s26, 7
      %p163 = por %p161, %p162
      %p164 = scmp.ne.s32.totalorder %s155, %s156
      %p165 = scmp.eq.s32.totalorder %s26, 0
      %p166 = por %p164, %p165
      %p167 = scmp.ne.s32.totalorder %s155, %s156
      %p168 = scmp.eq.s32.totalorder %s27, 7
      %p169 = por %p167, %p168
      %p171 = scmp.ne.s32.totalorder %s156, %s170
      %p172 = scmp.eq.s32.totalorder %s27, 0
      %p173 = por %p171, %p172
      %s175 = sadd.s32 %s174, 1
      %p178 = scmp.eq.s32.totalorder %s21, 7
      %p179 = scmp.ne.s32.totalorder %s174, %s176
      %p180 = scmp.eq.s32.totalorder %s21, 0
      %p181 = por %p179, %p180
      %p182 = scmp.ne.s32.totalorder %s174, %s176
      %p183 = scmp.eq.s32.totalorder %s26, 7
      %p184 = por %p182, %p183
      %p185 = scmp.ne.s32.totalorder %s176, %s177
      %p186 = scmp.eq.s32.totalorder %s26, 0
      %p187 = por %p185, %p186
      %p188 = scmp.ne.s32.totalorder %s176, %s177
      %p189 = scmp.eq.s32.totalorder %s27, 7
      %p190 = por %p188, %p189
      %p192 = scmp.ne.s32.totalorder %s177, %s191
      %p193 = scmp.eq.s32.totalorder %s27, 0
      %p194 = por %p192, %p193
      %s196 = sadd.s32 %s195, 1
      %p199 = scmp.eq.s32.totalorder %s21, 7
      %p200 = scmp.ne.s32.totalorder %s195, %s197
      %p201 = scmp.eq.s32.totalorder %s21, 0
      %p202 = por %p200, %p201
      %p203 = scmp.ne.s32.totalorder %s195, %s197
      %p204 = scmp.eq.s32.totalorder %s26, 7
      %p205 = por %p203, %p204
      %p206 = scmp.ne.s32.totalorder %s197, %s198
      %p207 = scmp.eq.s32.totalorder %s26, 0
      %p208 = por %p206, %p207
      %p209 = scmp.ne.s32.totalorder %s197, %s198
      %p210 = scmp.eq.s32.totalorder %s27, 7
      %p211 = por %p209, %p210
      %p213 = scmp.ne.s32.totalorder %s198, %s212
      %p214 = scmp.eq.s32.totalorder %s27, 0
      %p215 = por %p213, %p214
      %s216 = ssub.s32 %s28, %s40
      %p217 = scmp.eq.s32.totalorder %s216, 0
      %s219 = sadd.s32 %s218, 1
      %s220 = scalar_select %p217, %s218, %s219
      %p223 = pneg %p217
      %p224 = scmp.eq.s32.totalorder %s21, 7
      %p225 = por %p223, %p224
      %p226 = scmp.ne.s32.totalorder %s218, %s221
      %p227 = scmp.eq.s32.totalorder %s21, 0
      %p228 = por %p226, %p227
      %p229 = scmp.ne.s32.totalorder %s218, %s221
      %p230 = scmp.eq.s32.totalorder %s26, 7
      %p231 = por %p229, %p230
      %p232 = scmp.ne.s32.totalorder %s221, %s222
      %p233 = scmp.eq.s32.totalorder %s26, 0
      %p234 = por %p232, %p233
      %p235 = scmp.ne.s32.totalorder %s221, %s222
      %p236 = scmp.eq.s32.totalorder %s27, 7
      %p237 = por %p235, %p236
      %p239 = scmp.ne.s32.totalorder %s222, %s238
      %p240 = scmp.eq.s32.totalorder %s27, 0
      %p241 = por %p239, %p240
      %p242 = scmp.le.s32.totalorder 1, %s21
      %p243 = scmp.lt.s32.totalorder %s21, 9
      %p244 = pnand %p242, %p243
      %p245 = pneg %p244
      // Predicated region
      $region9: #{tpu_custom_call.1} parent=5 // pred_check
        _
      $region10: #{tpu_custom_call.1} parent=5 // pred_check_branch
        %247 = sbr.rel (%p244) target = $region12
      $region11: #{tpu_custom_call.1} parent=5 // pred_region
        %s248 = ssub.s32 %s21, 1
        // Predicated region
        $region13: #{tpu_custom_call.1} parent=11 // pred_check
          %p249 = pneg %p82
        $region14: #{tpu_custom_call.1} parent=11 // pred_check_branch
          %251 = sbr.rel (%p249) target = $region16
        $region15: #{tpu_custom_call.1} parent=11 // pred_region
          _
        $region16: #{tpu_custom_call.1} parent=11 // pred_fallthru
          _
        // Predicated region
        $region17: #{tpu_custom_call.1} parent=11 // pred_check
          %p252 = pneg %p103
        $region18: #{tpu_custom_call.1} parent=11 // pred_check_branch
          %254 = sbr.rel (%p252) target = $region20
        $region19: #{tpu_custom_call.1} parent=11 // pred_region
          _
        $region20: #{tpu_custom_call.1} parent=11 // pred_fallthru
          _
        // Predicated region
        $region21: #{tpu_custom_call.1} parent=11 // pred_check
          %p255 = pneg %p124
        $region22: #{tpu_custom_call.1} parent=11 // pred_check_branch
          %257 = sbr.rel (%p255) target = $region24
        $region23: #{tpu_custom_call.1} parent=11 // pred_region
          _
        $region24: #{tpu_custom_call.1} parent=11 // pred_fallthru
          _
        // Predicated region
        $region25: #{tpu_custom_call.1} parent=11 // pred_check
          %p258 = pneg %p145
        $region26: #{tpu_custom_call.1} parent=11 // pred_check_branch
          %260 = sbr.rel (%p258) target = $region28
        $region27: #{tpu_custom_call.1} parent=11 // pred_region
          %s262 = ssub.s32 512, 512
          %263 = vsyncadd [#allocation9], %s262
          %s264 = sshll.u32 [#allocation8], 4
          %s265 = int_to_ptr.vmem [resolvable:$true] %s264
          %270 = dma.hbm_to_vmem [thread:$0]  %s4, 512, %s265, [#allocation9], 128, 128, 8
        $region28: #{tpu_custom_call.1} parent=11 // pred_fallthru
          _
        // Predicated region
        $region29: #{tpu_custom_call.1} parent=11 // pred_check
          %p271 = pneg %p166
        $region30: #{tpu_custom_call.1} parent=11 // pred_check_branch
          %273 = sbr.rel (%p271) target = $region32
        $region31: #{tpu_custom_call.1} parent=11 // pred_region
          _
        $region32: #{tpu_custom_call.1} parent=11 // pred_fallthru
          _
        // Predicated region
        $region33: #{tpu_custom_call.1} parent=11 // pred_check
          %p274 = pneg %p187
        $region34: #{tpu_custom_call.1} parent=11 // pred_check_branch
          %276 = sbr.rel (%p274) target = $region36
        $region35: #{tpu_custom_call.1} parent=11 // pred_region
          _
        $region36: #{tpu_custom_call.1} parent=11 // pred_fallthru
          _
        // Predicated region
        $region37: #{tpu_custom_call.1} parent=11 // pred_check
          %p277 = pneg %p208
        $region38: #{tpu_custom_call.1} parent=11 // pred_check_branch
          %279 = sbr.rel (%p277) target = $region40
        $region39: #{tpu_custom_call.1} parent=11 // pred_region
          _
        $region40: #{tpu_custom_call.1} parent=11 // pred_fallthru
          _
      $region12: #{tpu_custom_call.1} parent=5 // pred_fallthru
        _
      %p280 = scmp.lt.s32.totalorder %s21, 8
      // Predicated region
      $region41: #{tpu_custom_call.1} parent=5 // pred_check
        %p281 = pneg %p280
      $region42: #{tpu_custom_call.1} parent=5 // pred_check_branch
        %283 = sbr.rel (%p281) target = $region44
      $region43: #{tpu_custom_call.1} parent=5 // pred_region
        // Predicated region
        $region45: #{tpu_custom_call.1} parent=43 // pred_check
          %p284 = pneg %p55
        $region46: #{tpu_custom_call.1} parent=43 // pred_check_branch
          %286 = sbr.rel (%p284) target = $region48
        $region47: #{tpu_custom_call.1} parent=43 // pred_region
          %s287 = sand.u32 %s45, 1
          %s288 = scalar_lea.sflag [#allocation6], %s287
          %s289 = sand.u32 %s45, 1
          %s290 = smul.addr %s289, 64
          %s291 = scalar_lea.vmem [#allocation5], %s290
          %s292 = smul.u32 8, %s29
          %s294 = ssub.s32 1024, 1024
          %295 = vsyncadd %s288, %s294
          %s296 = smul.addr %s28, 16
          %s297 = sadd.s32 %s292, %s296
          %s298 = smul.addr %s297, 128
          %s299 = scalar_lea.hbm %s0, %s298
          %s300 = sshll.u32 %s291, 4
          %s301 = int_to_ptr.vmem [resolvable:$true] %s300
          %306 = dma.hbm_to_vmem [thread:$0]  %s299, 1024, %s301, %s288, 128, 128, 8
        $region48: #{tpu_custom_call.1} parent=43 // pred_fallthru
          _
      $region44: #{tpu_custom_call.1} parent=5 // pred_fallthru
        _
      %p307 = scmp.le.s32.totalorder 1, %s21
      %p308 = scmp.lt.s32.totalorder %s21, 9
      %p309 = pnand %p307, %p308
      %p310 = pneg %p309
      // Predicated region
      $region49: #{tpu_custom_call.1} parent=5 // pred_check
        _
      $region50: #{tpu_custom_call.1} parent=5 // pred_check_branch
        %312 = sbr.rel (%p309) target = $region52
      $region51: #{tpu_custom_call.1} parent=5 // pred_region
        %s313 = ssub.s32 %s21, 1
        %s314 = sand.u32 %s48, 1
        %s315 = scalar_lea.sflag [#allocation6], %s314
        %s316 = sand.u32 %s48, 1
        %s317 = smul.addr %s316, 64
        %s318 = scalar_lea.vmem [#allocation5], %s317
        // Predicated region
        $region53: #{tpu_custom_call.1} parent=51 // pred_check
          %p319 = pneg %p61
        $region54: #{tpu_custom_call.1} parent=51 // pred_check_branch
          %321 = sbr.rel (%p319) target = $region56
        $region55: #{tpu_custom_call.1} parent=51 // pred_region
          %322 = dma.done %s315, 1024
        $region56: #{tpu_custom_call.1} parent=51 // pred_fallthru
          _
        // Predicated region
        $region57: #{tpu_custom_call.1} parent=51 // pred_check
          %p323 = pneg %p145
        $region58: #{tpu_custom_call.1} parent=51 // pred_check_branch
          %325 = sbr.rel (%p323) target = $region60
        $region59: #{tpu_custom_call.1} parent=51 // pred_region
          %326 = dma.done [#allocation9], 512
        $region60: #{tpu_custom_call.1} parent=51 // pred_fallthru
          _
        %s327 = sand.u32 %s48, 1
        %s328 = scalar_lea.sflag [#allocation6], %s327
        %s329 = sand.u32 %s48, 1
        %s330 = smul.addr %s329, 64
        %s331 = scalar_lea.vmem [#allocation5], %s330
        %p332 = pneg %p61
        %p333 = pneg %p58
        %p334 = pneg %p82
        %p335 = pneg %p79
        %p336 = pneg %p103
        %p337 = pneg %p100
        %p338 = pneg %p124
        %p339 = pneg %p121
        %p340 = pneg %p145
        %p341 = pneg %p142
        %p342 = pneg %p166
        %p343 = pneg %p163
        %p344 = pneg %p187
        %p345 = pneg %p184
        %p346 = pneg %p208
        %p347 = pneg %p205
        %p348 = pneg %p234
        %p349 = pneg %p231
        %s350 = sand.u32 %s221, 1
        %s351 = scalar_lea.sflag [#allocation7], %s350
        %s352 = sand.u32 %s221, 1
        %s353 = smul.addr %s352, 8
        %s354 = scalar_lea.vmem [#allocation10], %s353
        %s355 = smul.u32 8, %s31
        %p356 = scmp.eq.s32.totalorder %s31, 0
        // Predicated region
        $region61: #{tpu_custom_call.1} parent=51 // pred_check
          %p357 = pneg %p356
        $region62: #{tpu_custom_call.1} parent=51 // pred_check_branch
          %359 = sbr.rel (%p357) target = $region64
        $region63: #{tpu_custom_call.1} parent=51 // pred_region
          %vm360 = vcmask 31744
          %361 = vst.msk [vmem:[#allocation2] sm:$0xff] %vm360, -inf
          %362 = vst.msk [vmem:[#allocation3] sm:$0xff] %vm360, 0.0
          %vm363 = vcmask 261120
          %364 = vst.msk [vmem:[#allocation4] sm:$0xff] %vm363, 0.0
        $region64: #{tpu_custom_call.1} parent=51 // pred_fallthru
          _
        %v365 = vld [vmem:[%s318] sm:$0xff]
        %v366 = vld [vmem:[%s318 + $0x8] sm:$0xff]
        %v367 = vld [vmem:[%s318 + $0x10] sm:$0xff]
        %v368 = vld [vmem:[%s318 + $0x18] sm:$0xff]
        %v369 = vld [vmem:[%s318 + $0x20] sm:$0xff]
        %v370 = vld [vmem:[%s318 + $0x28] sm:$0xff]
        %v371 = vld [vmem:[%s318 + $0x30] sm:$0xff]
        %v372 = vld [vmem:[%s318 + $0x38] sm:$0xff]
        %v373 = vld [vmem:[%s2] sm:$0xff]
        %v374 = vld [vmem:[%s2 + $0x8] sm:$0xff]
        %v375 = vld [vmem:[%s2 + $0x10] sm:$0xff]
        %v376 = vld [vmem:[%s2 + $0x18] sm:$0xff]
        %v377 = vld [vmem:[%s3] sm:$0x1]
        %v379 = vlaneseq
        %v380 = vshrl.u32 %v379, 7
        %v381 = vsub.s32 0, %v380
        %v382 = vrot.slane %v377, %v381
        %vm384 = vcmask 261120
        %v386 = vsel %vm384, %v365, 0
        %v389 = vsel %vm384, %v366, 0
        %v392 = vsel %vm384, %v367, 0
        %v395 = vsel %vm384, %v368, 0
        %v398 = vsel %vm384, %v369, 0
        %v401 = vsel %vm384, %v370, 0
        %v404 = vsel %vm384, %v371, 0
        %v407 = vsel %vm384, %v372, 0
        %409 = vmatprep.subr.mxu0 0.0
        %410 = vmatpush1.msra.mxu0 %v373
        %411 = vmatprep.subr.mxu0 0.0
        %412 = vmatpush1.msra.mxu0 %v374
        %413 = vmatprep.subr.mxu0 0.0
        %414 = vmatpush1.msra.mxu0 %v375
        %415 = vmatprep.subr.mxu0 0.0
        %416 = vmatpush1.msra.mxu0 %v376
        %417 = vmatprep.subr.mxu0 0.0
        %418 = vmatpush1.msra.mxu0 0.0
        %419 = vmatprep.subr.mxu0 0.0
        %420 = vmatpush1.msra.mxu0 0.0
        %421 = vmatprep.subr.mxu0 0.0
        %422 = vmatpush1.msra.mxu0 0.0
        %423 = vmatprep.subr.mxu0 0.0
        %424 = vmatpush1.msra.mxu0 0.0
        %425 = vmatprep.subr.mxu0 0.0
        %426 = vmatpush1.msra.mxu0 0.0
        %427 = vmatprep.subr.mxu0 0.0
        %428 = vmatpush1.msra.mxu0 0.0
        %429 = vmatprep.subr.mxu0 0.0
        %430 = vmatpush1.msra.mxu0 0.0
        %431 = vmatprep.subr.mxu0 0.0
        %432 = vmatpush1.msra.mxu0 0.0
        %433 = vmatprep.subr.mxu0 0.0
        %434 = vmatpush1.msra.mxu0 0.0
        %435 = vmatprep.subr.mxu0 0.0
        %436 = vmatpush1.msra.mxu0 0.0
        %437 = vmatprep.subr.mxu0 0.0
        %438 = vmatpush1.msra.mxu0 0.0
        %439 = vmatprep.subr.mxu0 0.0
        %440 = vmatpush1.msra.mxu0 0.0
        %441 = vmatprep.subr.mxu0 0.0
        %442 = vmatpush1.msra.mxu0 0.0
        %443 = vmatprep.subr.mxu0 0.0
        %444 = vmatpush1.msra.mxu0 0.0
        %445 = vmatprep.subr.mxu0 0.0
        %446 = vmatpush1.msra.mxu0 0.0
        %447 = vmatprep.subr.mxu0 0.0
        %448 = vmatpush1.msra.mxu0 0.0
        %449 = vmatprep.subr.mxu0 0.0
        %450 = vmatpush1.msra.mxu0 0.0
        %451 = vmatprep.subr.mxu0 0.0
        %452 = vmatpush1.msra.mxu0 0.0
        %453 = vmatprep.subr.mxu0 0.0
        %454 = vmatpush1.msra.mxu0 0.0
        %455 = vmatprep.subr.mxu0 0.0
        %456 = vmatpush1.msra.mxu0 0.0
        %457 = vmatprep.subr.mxu0 0.0
        %458 = vmatpush1.msra.mxu0 0.0
        %459 = vmatprep.subr.mxu0 0.0
        %460 = vmatpush1.msra.mxu0 0.0
        %461 = vmatprep.subr.mxu0 0.0
        %462 = vmatpush1.msra.mxu0 0.0
        %463 = vmatprep.subr.mxu0 0.0
        %464 = vmatpush1.msra.mxu0 0.0
        %465 = vmatprep.subr.mxu0 0.0
        %466 = vmatpush1.msra.mxu0 0.0
        %467 = vmatprep.subr.mxu0 0.0
        %468 = vmatpush1.msra.mxu0 0.0
        %469 = vmatprep.subr.mxu0 0.0
        %470 = vmatpush1.msra.mxu0 0.0
        %471 = vmatprep.subr.mxu0 0.0
        %472 = vmatpush1.msra.mxu0 0.0
        %473 = vmatprep.mubr.f32.mxu0 0.0
        %474 = vmatmul.mubr.f32.gmra.mrb[0].mxu0 %v386
        %v475 = vpop.f32.mrb[0].mxu0
        %v476 = vadd.f32 %v382, %v475
        %v477 = vpop.f32.mrb[0].mxu0
        %478 = vmatprep.mubr.f32.mxu0 0.0
        %479 = vmatmul.mubr.f32.gmra.mrb[0].mxu0 %v389
        %v480 = vpop.f32.mrb[0].mxu0
        %v481 = vadd.f32 %v382, %v480
        %v482 = vpop.f32.mrb[0].mxu0
        %483 = vmatprep.mubr.f32.mxu0 0.0
        %484 = vmatmul.mubr.f32.gmra.mrb[0].mxu0 %v392
        %v485 = vpop.f32.mrb[0].mxu0
        %v486 = vadd.f32 %v382, %v485
        %v487 = vpop.f32.mrb[0].mxu0
        %488 = vmatprep.mubr.f32.mxu0 0.0
        %489 = vmatmul.mubr.f32.gmra.mrb[0].mxu0 %v395
        %v490 = vpop.f32.mrb[0].mxu0
        %v491 = vadd.f32 %v382, %v490
        %v492 = vpop.f32.mrb[0].mxu0
        %493 = vmatprep.mubr.f32.mxu0 0.0
        %494 = vmatmul.mubr.f32.gmra.mrb[0].mxu0 %v398
        %v495 = vpop.f32.mrb[0].mxu0
        %v496 = vadd.f32 %v382, %v495
        %v497 = vpop.f32.mrb[0].mxu0
        %498 = vmatprep.mubr.f32.mxu0 0.0
        %499 = vmatmul.mubr.f32.gmra.mrb[0].mxu0 %v401
        %v500 = vpop.f32.mrb[0].mxu0
        %v501 = vadd.f32 %v382, %v500
        %v502 = vpop.f32.mrb[0].mxu0
        %503 = vmatprep.mubr.f32.mxu0 0.0
        %504 = vmatmul.mubr.f32.gmra.mrb[0].mxu0 %v404
        %v505 = vpop.f32.mrb[0].mxu0
        %v506 = vadd.f32 %v382, %v505
        %v507 = vpop.f32.mrb[0].mxu0
        %508 = vmatprep.mubr.f32.mxu0 0.0
        %509 = vmatmul.mubr.f32.gmra.mrb[0].mxu0 %v407
        %v510 = vpop.f32.mrb[0].mxu0
        %v511 = vadd.f32 %v382, %v510
        %v512 = vpop.f32.mrb[0].mxu0
        %513 = vdwg.mxu0
        %v514 = vld [vmem:[#allocation8] sm:$0xff]
        %v515 = vld [vmem:[#allocation8 + $0x8] sm:$0xff]
        %v516 = vld [vmem:[#allocation8 + $0x10] sm:$0xff]
        %v517 = vld [vmem:[#allocation8 + $0x18] sm:$0xff]
        %v518 = vld [vmem:[%s5] sm:$0x1]
        %v520 = vlaneseq
        %v521 = vshrl.u32 %v520, 7
        %v522 = vsub.s32 0, %v521
        %v523 = vrot.slane %v518, %v522
        %525 = vmatprep.subr.mxu0 0.0
        %526 = vmatpush1.msra.mxu0 %v514
        %527 = vmatprep.subr.mxu0 0.0
        %528 = vmatpush1.msra.mxu0 %v515
        %529 = vmatprep.subr.mxu0 0.0
        %530 = vmatpush1.msra.mxu0 %v516
        %531 = vmatprep.subr.mxu0 0.0
        %532 = vmatpush1.msra.mxu0 %v517
        %533 = vmatprep.subr.mxu0 0.0
        %534 = vmatpush1.msra.mxu0 0.0
        %535 = vmatprep.subr.mxu0 0.0
        %536 = vmatpush1.msra.mxu0 0.0
        %537 = vmatprep.subr.mxu0 0.0
        %538 = vmatpush1.msra.mxu0 0.0
        %539 = vmatprep.subr.mxu0 0.0
        %540 = vmatpush1.msra.mxu0 0.0
        %541 = vmatprep.subr.mxu0 0.0
        %542 = vmatpush1.msra.mxu0 0.0
        %543 = vmatprep.subr.mxu0 0.0
        %544 = vmatpush1.msra.mxu0 0.0
        %545 = vmatprep.subr.mxu0 0.0
        %546 = vmatpush1.msra.mxu0 0.0
        %547 = vmatprep.subr.mxu0 0.0
        %548 = vmatpush1.msra.mxu0 0.0
        %549 = vmatprep.subr.mxu0 0.0
        %550 = vmatpush1.msra.mxu0 0.0
        %551 = vmatprep.subr.mxu0 0.0
        %552 = vmatpush1.msra.mxu0 0.0
        %553 = vmatprep.subr.mxu0 0.0
        %554 = vmatpush1.msra.mxu0 0.0
        %555 = vmatprep.subr.mxu0 0.0
        %556 = vmatpush1.msra.mxu0 0.0
        %557 = vmatprep.subr.mxu0 0.0
        %558 = vmatpush1.msra.mxu0 0.0
        %559 = vmatprep.subr.mxu0 0.0
        %560 = vmatpush1.msra.mxu0 0.0
        %561 = vmatprep.subr.mxu0 0.0
        %562 = vmatpush1.msra.mxu0 0.0
        %563 = vmatprep.subr.mxu0 0.0
        %564 = vmatpush1.msra.mxu0 0.0
        %565 = vmatprep.subr.mxu0 0.0
        %566 = vmatpush1.msra.mxu0 0.0
        %567 = vmatprep.subr.mxu0 0.0
        %568 = vmatpush1.msra.mxu0 0.0
        %569 = vmatprep.subr.mxu0 0.0
        %570 = vmatpush1.msra.mxu0 0.0
        %571 = vmatprep.subr.mxu0 0.0
        %572 = vmatpush1.msra.mxu0 0.0
        %573 = vmatprep.subr.mxu0 0.0
        %574 = vmatpush1.msra.mxu0 0.0
        %575 = vmatprep.subr.mxu0 0.0
        %576 = vmatpush1.msra.mxu0 0.0
        %577 = vmatprep.subr.mxu0 0.0
        %578 = vmatpush1.msra.mxu0 0.0
        %579 = vmatprep.subr.mxu0 0.0
        %580 = vmatpush1.msra.mxu0 0.0
        %581 = vmatprep.subr.mxu0 0.0
        %582 = vmatpush1.msra.mxu0 0.0
        %583 = vmatprep.subr.mxu0 0.0
        %584 = vmatpush1.msra.mxu0 0.0
        %585 = vmatprep.subr.mxu0 0.0
        %586 = vmatpush1.msra.mxu0 0.0
        %587 = vmatprep.subr.mxu0 0.0
        %588 = vmatpush1.msra.mxu0 0.0
        %589 = vmatprep.mubr.f32.mxu0 0.0
        %590 = vmatmul.mubr.f32.gmra.mrb[0].mxu0 %v386
        %v591 = vpop.f32.mrb[0].mxu0
        %v592 = vadd.f32 %v523, %v591
        %v593 = vpop.f32.mrb[0].mxu0
        %594 = vmatprep.mubr.f32.mxu0 0.0
        %595 = vmatmul.mubr.f32.gmra.mrb[0].mxu0 %v389
        %v596 = vpop.f32.mrb[0].mxu0
        %v597 = vadd.f32 %v523, %v596
        %v598 = vpop.f32.mrb[0].mxu0
        %599 = vmatprep.mubr.f32.mxu0 0.0
        %600 = vmatmul.mubr.f32.gmra.mrb[0].mxu0 %v392
        %v601 = vpop.f32.mrb[0].mxu0
        %v602 = vadd.f32 %v523, %v601
        %v603 = vpop.f32.mrb[0].mxu0
        %604 = vmatprep.mubr.f32.mxu0 0.0
        %605 = vmatmul.mubr.f32.gmra.mrb[0].mxu0 %v395
        %v606 = vpop.f32.mrb[0].mxu0
        %v607 = vadd.f32 %v523, %v606
        %v608 = vpop.f32.mrb[0].mxu0
        %609 = vmatprep.mubr.f32.mxu0 0.0
        %610 = vmatmul.mubr.f32.gmra.mrb[0].mxu0 %v398
        %v611 = vpop.f32.mrb[0].mxu0
        %v612 = vadd.f32 %v523, %v611
        %v613 = vpop.f32.mrb[0].mxu0
        %614 = vmatprep.mubr.f32.mxu0 0.0
        %615 = vmatmul.mubr.f32.gmra.mrb[0].mxu0 %v401
        %v616 = vpop.f32.mrb[0].mxu0
        %v617 = vadd.f32 %v523, %v616
        %v618 = vpop.f32.mrb[0].mxu0
        %619 = vmatprep.mubr.f32.mxu0 0.0
        %620 = vmatmul.mubr.f32.gmra.mrb[0].mxu0 %v404
        %v621 = vpop.f32.mrb[0].mxu0
        %v622 = vadd.f32 %v523, %v621
        %v623 = vpop.f32.mrb[0].mxu0
        %624 = vmatprep.mubr.f32.mxu0 0.0
        %625 = vmatmul.mubr.f32.gmra.mrb[0].mxu0 %v407
        %v626 = vpop.f32.mrb[0].mxu0
        %v627 = vadd.f32 %v523, %v626
        %v628 = vpop.f32.mrb[0].mxu0
        %629 = vdwg.mxu0
        %v630 = vld [vmem:[%s1] sm:$0xff]
        %v631 = vld [vmem:[%s6] sm:$0xff]
        %v632 = vld [vmem:[%s6 + $0x8] sm:$0xff]
        %v633 = vld [vmem:[%s6 + $0x10] sm:$0xff]
        %v634 = vld [vmem:[%s6 + $0x18] sm:$0xff]
        %v635 = vld [vmem:[%s7] sm:$0xf]
        %v636 = vmul.f32 %v476, %v630
        %v637 = vmul.f32 %v481, %v630
        %v638 = vmul.f32 %v486, %v630
        %v639 = vmul.f32 %v491, %v630
        %v640 = vmul.f32 %v496, %v630
        %v641 = vmul.f32 %v501, %v630
        %v642 = vmul.f32 %v506, %v630
        %v643 = vmul.f32 %v511, %v630
        %v645 = vsel %vm384, %v636, 0
        %v648 = vsel %vm384, %v637, 0
        %v651 = vsel %vm384, %v638, 0
        %v654 = vsel %vm384, %v639, 0
        %v657 = vsel %vm384, %v640, 0
        %v660 = vsel %vm384, %v641, 0
        %v663 = vsel %vm384, %v642, 0
        %v666 = vsel %vm384, %v643, 0
        %668 = vmatprep.subr.mxu0 0.0
        %669 = vmatpush1.msra.mxu0 %v631
        %670 = vmatprep.subr.mxu0 0.0
        %671 = vmatpush1.msra.mxu0 %v632
        %672 = vmatprep.subr.mxu0 0.0
        %673 = vmatpush1.msra.mxu0 %v633
        %674 = vmatprep.subr.mxu0 0.0
        %675 = vmatpush1.msra.mxu0 %v634
        %676 = vmatprep.subr.mxu0 0.0
        %677 = vmatpush1.msra.mxu0 0.0
        %678 = vmatprep.subr.mxu0 0.0
        %679 = vmatpush1.msra.mxu0 0.0
        %680 = vmatprep.subr.mxu0 0.0
        %681 = vmatpush1.msra.mxu0 0.0
        %682 = vmatprep.subr.mxu0 0.0
        %683 = vmatpush1.msra.mxu0 0.0
        %684 = vmatprep.subr.mxu0 0.0
        %685 = vmatpush1.msra.mxu0 0.0
        %686 = vmatprep.subr.mxu0 0.0
        %687 = vmatpush1.msra.mxu0 0.0
        %688 = vmatprep.subr.mxu0 0.0
        %689 = vmatpush1.msra.mxu0 0.0
        %690 = vmatprep.subr.mxu0 0.0
        %691 = vmatpush1.msra.mxu0 0.0
        %692 = vmatprep.subr.mxu0 0.0
        %693 = vmatpush1.msra.mxu0 0.0
        %694 = vmatprep.subr.mxu0 0.0
        %695 = vmatpush1.msra.mxu0 0.0
        %696 = vmatprep.subr.mxu0 0.0
        %697 = vmatpush1.msra.mxu0 0.0
        %698 = vmatprep.subr.mxu0 0.0
        %699 = vmatpush1.msra.mxu0 0.0
        %700 = vmatprep.subr.mxu0 0.0
        %701 = vmatpush1.msra.mxu0 0.0
        %702 = vmatprep.subr.mxu0 0.0
        %703 = vmatpush1.msra.mxu0 0.0
        %704 = vmatprep.subr.mxu0 0.0
        %705 = vmatpush1.msra.mxu0 0.0
        %706 = vmatprep.subr.mxu0 0.0
        %707 = vmatpush1.msra.mxu0 0.0
        %708 = vmatprep.subr.mxu0 0.0
        %709 = vmatpush1.msra.mxu0 0.0
        %710 = vmatprep.subr.mxu0 0.0
        %711 = vmatpush1.msra.mxu0 0.0
        %712 = vmatprep.subr.mxu0 0.0
        %713 = vmatpush1.msra.mxu0 0.0
        %714 = vmatprep.subr.mxu0 0.0
        %715 = vmatpush1.msra.mxu0 0.0
        %716 = vmatprep.subr.mxu0 0.0
        %717 = vmatpush1.msra.mxu0 0.0
        %718 = vmatprep.subr.mxu0 0.0
        %719 = vmatpush1.msra.mxu0 0.0
        %720 = vmatprep.subr.mxu0 0.0
        %721 = vmatpush1.msra.mxu0 0.0
        %722 = vmatprep.subr.mxu0 0.0
        %723 = vmatpush1.msra.mxu0 0.0
        %724 = vmatprep.subr.mxu0 0.0
        %725 = vmatpush1.msra.mxu0 0.0
        %726 = vmatprep.subr.mxu0 0.0
        %727 = vmatpush1.msra.mxu0 0.0
        %728 = vmatprep.subr.mxu0 0.0
        %729 = vmatpush1.msra.mxu0 0.0
        %730 = vmatprep.subr.mxu0 0.0
        %731 = vmatpush1.msra.mxu0 0.0
        %732 = vmatprep.mubr.f32.mxu0 0.0
        %733 = vmatmul.mubr.f32.gmra.mrb[0].mxu0 %v645
        %v734 = vpop.f32.mrb[0].mxu0
        %v735 = vadd.f32 0.0, %v734
        %v736 = vpop.f32.mrb[0].mxu0
        %737 = vmatprep.mubr.f32.mxu0 0.0
        %738 = vmatmul.mubr.f32.gmra.mrb[0].mxu0 %v648
        %v739 = vpop.f32.mrb[0].mxu0
        %v740 = vadd.f32 0.0, %v739
        %v741 = vpop.f32.mrb[0].mxu0
        %742 = vmatprep.mubr.f32.mxu0 0.0
        %743 = vmatmul.mubr.f32.gmra.mrb[0].mxu0 %v651
        %v744 = vpop.f32.mrb[0].mxu0
        %v745 = vadd.f32 0.0, %v744
        %v746 = vpop.f32.mrb[0].mxu0
        %747 = vmatprep.mubr.f32.mxu0 0.0
        %748 = vmatmul.mubr.f32.gmra.mrb[0].mxu0 %v654
        %v749 = vpop.f32.mrb[0].mxu0
        %v750 = vadd.f32 0.0, %v749
        %v751 = vpop.f32.mrb[0].mxu0
        %752 = vmatprep.mubr.f32.mxu0 0.0
        %753 = vmatmul.mubr.f32.gmra.mrb[0].mxu0 %v657
        %v754 = vpop.f32.mrb[0].mxu0
        %v755 = vadd.f32 0.0, %v754
        %v756 = vpop.f32.mrb[0].mxu0
        %757 = vmatprep.mubr.f32.mxu0 0.0
        %758 = vmatmul.mubr.f32.gmra.mrb[0].mxu0 %v660
        %v759 = vpop.f32.mrb[0].mxu0
        %v760 = vadd.f32 0.0, %v759
        %v761 = vpop.f32.mrb[0].mxu0
        %762 = vmatprep.mubr.f32.mxu0 0.0
        %763 = vmatmul.mubr.f32.gmra.mrb[0].mxu0 %v663
        %v764 = vpop.f32.mrb[0].mxu0
        %v765 = vadd.f32 0.0, %v764
        %v766 = vpop.f32.mrb[0].mxu0
        %767 = vmatprep.mubr.f32.mxu0 0.0
        %768 = vmatmul.mubr.f32.gmra.mrb[0].mxu0 %v666
        %v769 = vpop.f32.mrb[0].mxu0
        %v770 = vadd.f32 0.0, %v769
        %v771 = vpop.f32.mrb[0].mxu0
        %772 = vdwg.mxu0
        %v773 = vld [vmem:[#allocation2] sm:$0xff]
        %vm774 = vcmask 31744
        %v775 = vsel %vm774, %v735, -inf
        %v776 = vsel %vm774, %v740, -inf
        %v777 = vsel %vm774, %v745, -inf
        %v778 = vsel %vm774, %v750, -inf
        %v779 = vsel %vm774, %v755, -inf
        %v780 = vmax.f32 %v775, %v779
        %v781 = vsel %vm774, %v760, -inf
        %v782 = vmax.f32 %v776, %v781
        %v783 = vsel %vm774, %v765, -inf
        %v784 = vmax.f32 %v777, %v783
        %v785 = vsel %vm774, %v770, -inf
        %v786 = vmax.f32 %v778, %v785
        %v787 = vmax.f32 %v780, %v782
        %v788 = vmax.f32 %v784, %v786
        %v789 = vmax.f32 %v787, %v788
        %v790 = vmax.f32 %v773, %v789
        %v791 = vsub.f32 %v773, %v790
        %v792 = vmul.f32 %v791, 1.442695
        %v793 = vpow.pop %v792
        %v794 = vsub.f32 %v735, %v790
        %v795 = vsub.f32 %v740, %v790
        %v796 = vsub.f32 %v745, %v790
        %v797 = vsub.f32 %v750, %v790
        %v798 = vsub.f32 %v755, %v790
        %v799 = vsub.f32 %v760, %v790
        %v800 = vsub.f32 %v765, %v790
        %v801 = vsub.f32 %v770, %v790
        %v802 = vmul.f32 %v794, 1.442695
        %v803 = vpow.pop %v802
        %v804 = vmul.f32 %v795, 1.442695
        %v805 = vpow.pop %v804
        %v806 = vmul.f32 %v796, 1.442695
        %v807 = vpow.pop %v806
        %v808 = vmul.f32 %v797, 1.442695
        %v809 = vpow.pop %v808
        %v810 = vmul.f32 %v798, 1.442695
        %v811 = vpow.pop %v810
        %v812 = vmul.f32 %v799, 1.442695
        %v813 = vpow.pop %v812
        %v814 = vmul.f32 %v800, 1.442695
        %v815 = vpow.pop %v814
        %v816 = vmul.f32 %v801, 1.442695
        %v817 = vpow.pop %v816
        %v818 = vld [vmem:[#allocation3] sm:$0xff]
        %v819 = vmul.f32 %v793, %v818
        %v820 = vsel %vm774, %v803, 0.0
        %v821 = vsel %vm774, %v805, 0.0
        %v822 = vadd.f32 %v820, %v821
        %v823 = vsel %vm774, %v807, 0.0
        %v824 = vadd.f32 %v822, %v823
        %v825 = vsel %vm774, %v809, 0.0
        %v826 = vadd.f32 %v824, %v825
        %v827 = vsel %vm774, %v811, 0.0
        %v828 = vadd.f32 %v826, %v827
        %v829 = vsel %vm774, %v813, 0.0
        %v830 = vadd.f32 %v828, %v829
        %v831 = vsel %vm774, %v815, 0.0
        %v832 = vadd.f32 %v830, %v831
        %v833 = vsel %vm774, %v817, 0.0
        %v834 = vadd.f32 %v832, %v833
        %v835 = vadd.f32 %v819, %v834
        %836 = vst.msk [vmem:[#allocation3] sm:$0xff] %vm774, %v835
        %v838 = vsel %vm774, %v803, 0
        %v841 = vsel %vm774, %v805, 0
        %v844 = vsel %vm774, %v807, 0
        %v847 = vsel %vm774, %v809, 0
        %v850 = vsel %vm774, %v811, 0
        %v853 = vsel %vm774, %v813, 0
        %v856 = vsel %vm774, %v815, 0
        %v859 = vsel %vm774, %v817, 0
        %vm861 = vcmask 1043456
        %v863 = vsel %vm861, %v635, 0
        %865 = vmatprep.subr.mxu0 0.0
        %866 = vmatpush1.msra.mxu0 %v863
        %867 = vmatprep.subr.mxu0 0.0
        %868 = vmatpush1.msra.mxu0 0.0
        %869 = vmatprep.subr.mxu0 0.0
        %870 = vmatpush1.msra.mxu0 0.0
        %871 = vmatprep.subr.mxu0 0.0
        %872 = vmatpush1.msra.mxu0 0.0
        %873 = vmatprep.subr.mxu0 0.0
        %874 = vmatpush1.msra.mxu0 0.0
        %875 = vmatprep.subr.mxu0 0.0
        %876 = vmatpush1.msra.mxu0 0.0
        %877 = vmatprep.subr.mxu0 0.0
        %878 = vmatpush1.msra.mxu0 0.0
        %879 = vmatprep.subr.mxu0 0.0
        %880 = vmatpush1.msra.mxu0 0.0
        %881 = vmatprep.subr.mxu0 0.0
        %882 = vmatpush1.msra.mxu0 0.0
        %883 = vmatprep.subr.mxu0 0.0
        %884 = vmatpush1.msra.mxu0 0.0
        %885 = vmatprep.subr.mxu0 0.0
        %886 = vmatpush1.msra.mxu0 0.0
        %887 = vmatprep.subr.mxu0 0.0
        %888 = vmatpush1.msra.mxu0 0.0
        %889 = vmatprep.subr.mxu0 0.0
        %890 = vmatpush1.msra.mxu0 0.0
        %891 = vmatprep.subr.mxu0 0.0
        %892 = vmatpush1.msra.mxu0 0.0
        %893 = vmatprep.subr.mxu0 0.0
        %894 = vmatpush1.msra.mxu0 0.0
        %895 = vmatprep.subr.mxu0 0.0
        %896 = vmatpush1.msra.mxu0 0.0
        %897 = vmatprep.subr.mxu0 0.0
        %898 = vmatpush1.msra.mxu0 0.0
        %899 = vmatprep.subr.mxu0 0.0
        %900 = vmatpush1.msra.mxu0 0.0
        %901 = vmatprep.subr.mxu0 0.0
        %902 = vmatpush1.msra.mxu0 0.0
        %903 = vmatprep.subr.mxu0 0.0
        %904 = vmatpush1.msra.mxu0 0.0
        %905 = vmatprep.subr.mxu0 0.0
        %906 = vmatpush1.msra.mxu0 0.0
        %907 = vmatprep.subr.mxu0 0.0
        %908 = vmatpush1.msra.mxu0 0.0
        %909 = vmatprep.subr.mxu0 0.0
        %910 = vmatpush1.msra.mxu0 0.0
        %911 = vmatprep.subr.mxu0 0.0
        %912 = vmatpush1.msra.mxu0 0.0
        %913 = vmatprep.subr.mxu0 0.0
        %914 = vmatpush1.msra.mxu0 0.0
        %915 = vmatprep.subr.mxu0 0.0
        %916 = vmatpush1.msra.mxu0 0.0
        %917 = vmatprep.subr.mxu0 0.0
        %918 = vmatpush1.msra.mxu0 0.0
        %919 = vmatprep.subr.mxu0 0.0
        %920 = vmatpush1.msra.mxu0 0.0
        %921 = vmatprep.subr.mxu0 0.0
        %922 = vmatpush1.msra.mxu0 0.0
        %923 = vmatprep.subr.mxu0 0.0
        %924 = vmatpush1.msra.mxu0 0.0
        %925 = vmatprep.subr.mxu0 0.0
        %926 = vmatpush1.msra.mxu0 0.0
        %927 = vmatprep.subr.mxu0 0.0
        %928 = vmatpush1.msra.mxu0 0.0
        %929 = vmatprep.mubr.f32.mxu0 0.0
        %930 = vmatmul.mubr.f32.gmra.mrb[0].mxu0 %v838
        %v931 = vpop.f32.mrb[0].mxu0
        %v932 = vadd.f32 0.0, %v931
        %v933 = vpop.f32.mrb[0].mxu0
        %934 = vmatprep.mubr.f32.mxu0 0.0
        %935 = vmatmul.mubr.f32.gmra.mrb[0].mxu0 %v841
        %v936 = vpop.f32.mrb[0].mxu0
        %v937 = vadd.f32 0.0, %v936
        %v938 = vpop.f32.mrb[0].mxu0
        %939 = vmatprep.mubr.f32.mxu0 0.0
        %940 = vmatmul.mubr.f32.gmra.mrb[0].mxu0 %v844
        %v941 = vpop.f32.mrb[0].mxu0
        %v942 = vadd.f32 0.0, %v941
        %v943 = vpop.f32.mrb[0].mxu0
        %944 = vmatprep.mubr.f32.mxu0 0.0
        %945 = vmatmul.mubr.f32.gmra.mrb[0].mxu0 %v847
        %v946 = vpop.f32.mrb[0].mxu0
        %v947 = vadd.f32 0.0, %v946
        %v948 = vpop.f32.mrb[0].mxu0
        %949 = vmatprep.mubr.f32.mxu0 0.0
        %950 = vmatmul.mubr.f32.gmra.mrb[0].mxu0 %v850
        %v951 = vpop.f32.mrb[0].mxu0
        %v952 = vadd.f32 0.0, %v951
        %v953 = vpop.f32.mrb[0].mxu0
        %954 = vmatprep.mubr.f32.mxu0 0.0
        %955 = vmatmul.mubr.f32.gmra.mrb[0].mxu0 %v853
        %v956 = vpop.f32.mrb[0].mxu0
        %v957 = vadd.f32 0.0, %v956
        %v958 = vpop.f32.mrb[0].mxu0
        %959 = vmatprep.mubr.f32.mxu0 0.0
        %960 = vmatmul.mubr.f32.gmra.mrb[0].mxu0 %v856
        %v961 = vpop.f32.mrb[0].mxu0
        %v962 = vadd.f32 0.0, %v961
        %v963 = vpop.f32.mrb[0].mxu0
        %964 = vmatprep.mubr.f32.mxu0 0.0
        %965 = vmatmul.mubr.f32.gmra.mrb[0].mxu0 %v859
        %v966 = vpop.f32.mrb[0].mxu0
        %v967 = vadd.f32 0.0, %v966
        %v968 = vpop.f32.mrb[0].mxu0
        %969 = vdwg.mxu0
        %v971 = vsel %vm774, %v793, 0
        %973 = vmatprep.subr.mxu0 0.0
        %974 = vmatpush1.msra.mxu0 %v863
        %975 = vmatprep.subr.mxu0 0.0
        %976 = vmatpush1.msra.mxu0 0.0
        %977 = vmatprep.subr.mxu0 0.0
        %978 = vmatpush1.msra.mxu0 0.0
        %979 = vmatprep.subr.mxu0 0.0
        %980 = vmatpush1.msra.mxu0 0.0
        %981 = vmatprep.subr.mxu0 0.0
        %982 = vmatpush1.msra.mxu0 0.0
        %983 = vmatprep.subr.mxu0 0.0
        %984 = vmatpush1.msra.mxu0 0.0
        %985 = vmatprep.subr.mxu0 0.0
        %986 = vmatpush1.msra.mxu0 0.0
        %987 = vmatprep.subr.mxu0 0.0
        %988 = vmatpush1.msra.mxu0 0.0
        %989 = vmatprep.subr.mxu0 0.0
        %990 = vmatpush1.msra.mxu0 0.0
        %991 = vmatprep.subr.mxu0 0.0
        %992 = vmatpush1.msra.mxu0 0.0
        %993 = vmatprep.subr.mxu0 0.0
        %994 = vmatpush1.msra.mxu0 0.0
        %995 = vmatprep.subr.mxu0 0.0
        %996 = vmatpush1.msra.mxu0 0.0
        %997 = vmatprep.subr.mxu0 0.0
        %998 = vmatpush1.msra.mxu0 0.0
        %999 = vmatprep.subr.mxu0 0.0
        %1000 = vmatpush1.msra.mxu0 0.0
        %1001 = vmatprep.subr.mxu0 0.0
        %1002 = vmatpush1.msra.mxu0 0.0
        %1003 = vmatprep.subr.mxu0 0.0
        %1004 = vmatpush1.msra.mxu0 0.0
        %1005 = vmatprep.subr.mxu0 0.0
        %1006 = vmatpush1.msra.mxu0 0.0
        %1007 = vmatprep.subr.mxu0 0.0
        %1008 = vmatpush1.msra.mxu0 0.0
        %1009 = vmatprep.subr.mxu0 0.0
        %1010 = vmatpush1.msra.mxu0 0.0
        %1011 = vmatprep.subr.mxu0 0.0
        %1012 = vmatpush1.msra.mxu0 0.0
        %1013 = vmatprep.subr.mxu0 0.0
        %1014 = vmatpush1.msra.mxu0 0.0
        %1015 = vmatprep.subr.mxu0 0.0
        %1016 = vmatpush1.msra.mxu0 0.0
        %1017 = vmatprep.subr.mxu0 0.0
        %1018 = vmatpush1.msra.mxu0 0.0
        %1019 = vmatprep.subr.mxu0 0.0
        %1020 = vmatpush1.msra.mxu0 0.0
        %1021 = vmatprep.subr.mxu0 0.0
        %1022 = vmatpush1.msra.mxu0 0.0
        %1023 = vmatprep.subr.mxu0 0.0
        %1024 = vmatpush1.msra.mxu0 0.0
        %1025 = vmatprep.subr.mxu0 0.0
        %1026 = vmatpush1.msra.mxu0 0.0
        %1027 = vmatprep.subr.mxu0 0.0
        %1028 = vmatpush1.msra.mxu0 0.0
        %1029 = vmatprep.subr.mxu0 0.0
        %1030 = vmatpush1.msra.mxu0 0.0
        %1031 = vmatprep.subr.mxu0 0.0
        %1032 = vmatpush1.msra.mxu0 0.0
        %1033 = vmatprep.subr.mxu0 0.0
        %1034 = vmatpush1.msra.mxu0 0.0
        %1035 = vmatprep.subr.mxu0 0.0
        %1036 = vmatpush1.msra.mxu0 0.0
        %1037 = vmatprep.mubr.f32.mxu0 0.0
        %1038 = vmatmul.mubr.f32.gmra.mrb[0].mxu0 %v971
        %v1039 = vpop.f32.mrb[0].mxu0
        %v1040 = vadd.f32 0.0, %v1039
        %v1041 = vpop.f32.mrb[0].mxu0
        %1042 = vdwg.mxu0
        %v1043 = vld [vmem:[#allocation4] sm:$0xff]
        %v1044 = vmul.f32 %v1040, %v1043
        %v1045 = vmul.f32 %v932, %v592
        %v1046 = vmul.f32 %v937, %v597
        %v1047 = vmul.f32 %v942, %v602
        %v1048 = vmul.f32 %v947, %v607
        %v1049 = vmul.f32 %v952, %v612
        %v1050 = vmul.f32 %v957, %v617
        %v1051 = vmul.f32 %v962, %v622
        %v1052 = vmul.f32 %v967, %v627
        %v1053 = vsel %vm384, %v1045, 0.0
        %v1054 = vsel %vm384, %v1046, 0.0
        %v1055 = vadd.f32 %v1053, %v1054
        %v1056 = vsel %vm384, %v1047, 0.0
        %v1057 = vadd.f32 %v1055, %v1056
        %v1058 = vsel %vm384, %v1048, 0.0
        %v1059 = vadd.f32 %v1057, %v1058
        %v1060 = vsel %vm384, %v1049, 0.0
        %v1061 = vadd.f32 %v1059, %v1060
        %v1062 = vsel %vm384, %v1050, 0.0
        %v1063 = vadd.f32 %v1061, %v1062
        %v1064 = vsel %vm384, %v1051, 0.0
        %v1065 = vadd.f32 %v1063, %v1064
        %v1066 = vsel %vm384, %v1052, 0.0
        %v1067 = vadd.f32 %v1065, %v1066
        %v1068 = vadd.f32 %v1044, %v1067
        %1069 = vst.msk [vmem:[#allocation4] sm:$0xff] %vm384, %v1068
        %1070 = vst.msk [vmem:[#allocation2] sm:$0xff] %vm774, %v790
        %p1071 = scmp.eq.s32.totalorder %s31, 1
        // Predicated region
        $region65: #{tpu_custom_call.1} parent=51 // pred_check
          %p1072 = pneg %p1071
        $region66: #{tpu_custom_call.1} parent=51 // pred_check_branch
          %1074 = sbr.rel (%p1072) target = $region68
        $region67: #{tpu_custom_call.1} parent=51 // pred_region
          %v1075 = vld [vmem:[#allocation3] sm:$0xff]
          %v1077 = vsel %vm774, %v1075, 0
          %1079 = vmatprep.subr.mxu0 0.0
          %1080 = vmatpush1.msra.mxu0 %v863
          %1081 = vmatprep.subr.mxu0 0.0
          %1082 = vmatpush1.msra.mxu0 0.0
          %1083 = vmatprep.subr.mxu0 0.0
          %1084 = vmatpush1.msra.mxu0 0.0
          %1085 = vmatprep.subr.mxu0 0.0
          %1086 = vmatpush1.msra.mxu0 0.0
          %1087 = vmatprep.subr.mxu0 0.0
          %1088 = vmatpush1.msra.mxu0 0.0
          %1089 = vmatprep.subr.mxu0 0.0
          %1090 = vmatpush1.msra.mxu0 0.0
          %1091 = vmatprep.subr.mxu0 0.0
          %1092 = vmatpush1.msra.mxu0 0.0
          %1093 = vmatprep.subr.mxu0 0.0
          %1094 = vmatpush1.msra.mxu0 0.0
          %1095 = vmatprep.subr.mxu0 0.0
          %1096 = vmatpush1.msra.mxu0 0.0
          %1097 = vmatprep.subr.mxu0 0.0
          %1098 = vmatpush1.msra.mxu0 0.0
          %1099 = vmatprep.subr.mxu0 0.0
          %1100 = vmatpush1.msra.mxu0 0.0
          %1101 = vmatprep.subr.mxu0 0.0
          %1102 = vmatpush1.msra.mxu0 0.0
          %1103 = vmatprep.subr.mxu0 0.0
          %1104 = vmatpush1.msra.mxu0 0.0
          %1105 = vmatprep.subr.mxu0 0.0
          %1106 = vmatpush1.msra.mxu0 0.0
          %1107 = vmatprep.subr.mxu0 0.0
          %1108 = vmatpush1.msra.mxu0 0.0
          %1109 = vmatprep.subr.mxu0 0.0
          %1110 = vmatpush1.msra.mxu0 0.0
          %1111 = vmatprep.subr.mxu0 0.0
          %1112 = vmatpush1.msra.mxu0 0.0
          %1113 = vmatprep.subr.mxu0 0.0
          %1114 = vmatpush1.msra.mxu0 0.0
          %1115 = vmatprep.subr.mxu0 0.0
          %1116 = vmatpush1.msra.mxu0 0.0
          %1117 = vmatprep.subr.mxu0 0.0
          %1118 = vmatpush1.msra.mxu0 0.0
          %1119 = vmatprep.subr.mxu0 0.0
          %1120 = vmatpush1.msra.mxu0 0.0
          %1121 = vmatprep.subr.mxu0 0.0
          %1122 = vmatpush1.msra.mxu0 0.0
          %1123 = vmatprep.subr.mxu0 0.0
          %1124 = vmatpush1.msra.mxu0 0.0
          %1125 = vmatprep.subr.mxu0 0.0
          %1126 = vmatpush1.msra.mxu0 0.0
          %1127 = vmatprep.subr.mxu0 0.0
          %1128 = vmatpush1.msra.mxu0 0.0
          %1129 = vmatprep.subr.mxu0 0.0
          %1130 = vmatpush1.msra.mxu0 0.0
          %1131 = vmatprep.subr.mxu0 0.0
          %1132 = vmatpush1.msra.mxu0 0.0
          %1133 = vmatprep.subr.mxu0 0.0
          %1134 = vmatpush1.msra.mxu0 0.0
          %1135 = vmatprep.subr.mxu0 0.0
          %1136 = vmatpush1.msra.mxu0 0.0
          %1137 = vmatprep.subr.mxu0 0.0
          %1138 = vmatpush1.msra.mxu0 0.0
          %1139 = vmatprep.subr.mxu0 0.0
          %1140 = vmatpush1.msra.mxu0 0.0
          %1141 = vmatprep.subr.mxu0 0.0
          %1142 = vmatpush1.msra.mxu0 0.0
          %1143 = vmatprep.mubr.f32.mxu0 0.0
          %1144 = vmatmul.mubr.f32.gmra.mrb[0].mxu0 %v1077
          %v1145 = vpop.f32.mrb[0].mxu0
          %v1146 = vadd.f32 0.0, %v1145
          %v1147 = vpop.f32.mrb[0].mxu0
          %1148 = vdwg.mxu0
          %v1149 = vld [vmem:[#allocation4] sm:$0xff]
          %v1150 = vrcp.pop %v1146
          %v1151 = vmul.f32 %v1149, %v1150
          %v1152 = vadd.f32 %v630, %v1151
          %1153 = vst.msk [vmem:[%s354] sm:$0xff] %vm384, %v1152
        $region68: #{tpu_custom_call.1} parent=51 // pred_fallthru
          _
        %s1154 = sand.u32 %s221, 1
        %s1155 = scalar_lea.sflag [#allocation7], %s1154
        %s1156 = sand.u32 %s221, 1
        %s1157 = smul.addr %s1156, 8
        %s1158 = scalar_lea.vmem [#allocation10], %s1157
        // Predicated region
        $region69: #{tpu_custom_call.1} parent=51 // pred_check
          %p1159 = pneg %p231
        $region70: #{tpu_custom_call.1} parent=51 // pred_check_branch
          %1161 = sbr.rel (%p1159) target = $region72
        $region71: #{tpu_custom_call.1} parent=51 // pred_region
          %s1163 = ssub.s32 128, 128
          %1164 = vsyncadd %s1155, %s1163
          %s1165 = smul.addr %s30, 128
          %s1166 = scalar_lea.hbm %s8, %s1165
          %s1168 = sshll.u32 %s1158, 4
          %s1169 = int_to_ptr.vmem [resolvable:$true] %s1168
          %1171 = dma.vmem_to_hbm [thread:$0]  %s1169, 128, %s1166, %s1155
        $region72: #{tpu_custom_call.1} parent=51 // pred_fallthru
          _
      $region52: #{tpu_custom_call.1} parent=5 // pred_fallthru
        _
      %p1172 = scmp.le.s32.totalorder 2, %s21
      // Predicated region
      $region73: #{tpu_custom_call.1} parent=5 // pred_check
        %p1173 = pneg %p1172
      $region74: #{tpu_custom_call.1} parent=5 // pred_check_branch
        %1175 = sbr.rel (%p1173) target = $region76
      $region75: #{tpu_custom_call.1} parent=5 // pred_region
        %s1176 = ssub.s32 %s21, 2
        // Predicated region
        $region77: #{tpu_custom_call.1} parent=75 // pred_check
          %p1177 = pneg %p237
        $region78: #{tpu_custom_call.1} parent=75 // pred_check_branch
          %1179 = sbr.rel (%p1177) target = $region80
        $region79: #{tpu_custom_call.1} parent=75 // pred_region
          %s1180 = sand.u32 %s222, 1
          %s1181 = scalar_lea.sflag [#allocation7], %s1180
          %s1182 = sand.u32 %s222, 1
          %s1183 = smul.addr %s1182, 8
          %s1184 = scalar_lea.vmem [#allocation10], %s1183
          %1185 = dma.done %s1181, 128
        $region80: #{tpu_custom_call.1} parent=75 // pred_fallthru
          _
      $region76: #{tpu_custom_call.1} parent=5 // pred_fallthru
        _
    $region6: #{tpu_custom_call.1} parent=1 // loop_footer
      %s25 = sadd.s32 1, %s21
    $region7: #{tpu_custom_call.1} parent=1 // loop_footer_branch
      %20 = sbr.rel target = $region3
    $region8: #{tpu_custom_call.1} parent=1 // loop_exit
      _
    %1186 = vsyncpa [#allocation6], 1
    %s1187 = scalar_lea.sflag [#allocation6], 1
    %1188 = vsyncpa %s1187, 1
    %1189 = vsyncpa [#allocation9], 1
    %1190 = vsyncpa [#allocation7], 1
    %s1191 = scalar_lea.sflag [#allocation7], 1
    %1192 = vsyncpa %s1191, 1

</llo_original>
